<compile_context>
chip_gen: v7x
topology: tpu7x:2x2x1
jax: 0.10.0
libtpu: 0.0.40
codegen_flags: <defaults>
</compile_context>

<pallas_src>
import functools

import numpy as np
import jax
import jax.numpy as jnp
from jax import lax
from jax.experimental import pallas as pl
from jax.experimental.pallas import tpu as pltpu


# ----------------------------------------------------------------------------
# Deterministic parameter construction (glue, plain numpy)
# ----------------------------------------------------------------------------
def _round_up(x: int, m: int) -> int:
    return ((x + m - 1) // m) * m


def bark_filter_banks(nfilts: int, nfft: int, fs: int) -> np.ndarray:
    """Triangular filters on the (Schroeder) bark scale. Shape [nfilts, nfft//2+1]."""
    def hz2bark(f):
        return 6.0 * np.arcsinh(np.asarray(f, dtype=np.float64) / 600.0)

    def bark2hz(b):
        return 600.0 * np.sinh(np.asarray(b, dtype=np.float64) / 6.0)

    low_b, high_b = hz2bark(0.0), hz2bark(fs / 2.0)
    bark_pts = np.linspace(low_b, high_b, nfilts + 2)
    hz_pts = bark2hz(bark_pts)
    bins = np.floor((nfft + 1) * hz_pts / fs).astype(np.int64)

    fbank = np.zeros((nfilts, nfft // 2 + 1), dtype=np.float32)
    for m in range(1, nfilts + 1):
        l, c, r = int(bins[m - 1]), int(bins[m]), int(bins[m + 1])
        for k in range(l, c):
            if c > l:
                fbank[m - 1, k] = (k - l) / float(c - l)
        for k in range(c, r):
            if r > c:
                fbank[m - 1, k] = (r - k) / float(r - c)
    return fbank


def windowed_dft_basis(n_fft: int, n_freq: int) -> np.ndarray:
    """Periodic Hann window folded into a fused [n_fft, 2*n_freq] real|imag DFT basis."""
    n = np.arange(n_fft, dtype=np.float64)
    window = 0.5 * (1.0 - np.cos(2.0 * np.pi * n / n_fft))  # periodic hann
    k = np.arange(n_freq, dtype=np.float64)
    ang = 2.0 * np.pi * np.outer(n, k) / n_fft              # [n_fft, n_freq]
    cos_b = window[:, None] * np.cos(ang)
    sin_b = window[:, None] * -np.sin(ang)
    return np.concatenate([cos_b, sin_b], axis=1).astype(np.float32)  # [n_fft, 2*n_freq]


# ----------------------------------------------------------------------------
# Fused kernel: in-kernel framing -> DFT matmuls -> power -> bark filterbank ->
# running per-instance max -> in-place amplitude_to_db epilogue on the last tile.
# ----------------------------------------------------------------------------
def _bark_fused_kernel(cm_ref, ce_ref, basis_ref, fb_ref, out_ref, max_ref, *,
                       n_freq, n_parts, tile_frames, n_tiles):
    TF = tile_frames
    t = pl.program_id(1)

    # ---- in-kernel framing ----------------------------------------------------
    # Frame i = hop-chunks [i, i + n_parts) of the zero-padded waveform (only the
    # first 32 samples of the last chunk are used; the corresponding basis rows of
    # B_{n_parts-1} beyond that are zero).  So
    #   spec = sum_j  chunks[j : j+TF] @ B_j          (4 shifted-slice MXU matmuls)
    cm = cm_ref[0]                                           # [TF, hop]     f32
    ce = ce_ref[0]                                           # [EXTRA, hop]  f32
    c = jnp.concatenate([cm, ce], axis=0)                    # [TF+EXTRA, hop]

    spec = jnp.dot(c[0:TF].astype(jnp.bfloat16), basis_ref[0],
                   preferred_element_type=jnp.float32)       # [TF, 2*n_freq] f32
    for j in range(1, n_parts):
        spec = spec + jnp.dot(c[j:j + TF].astype(jnp.bfloat16), basis_ref[j],
                              preferred_element_type=jnp.float32)

    re = spec[:, :n_freq]                                    # tile-aligned slices (free)
    im = spec[:, n_freq:]
    power = re * re + im * im                                # [TF, n_freq] f32, >= 0

    # Bark filterbank projection (fb passed transposed + zero-padded to 128 lanes).
    # s_bark >= 0 everywhere (non-negative filters, zero-padded lanes stay exactly 0);
    # the running max and the padded frames rely on this invariant.
    s_bark = jnp.dot(power.astype(jnp.bfloat16), fb_ref[...],
                     preferred_element_type=jnp.float32)     # [TF, 128] f32, >= 0

    # Write this tile's energies into the VMEM-resident per-instance output block.
    frame_off = pl.multiple_of(t * TF, TF)
    out_ref[0, pl.ds(frame_off, TF), :] = s_bark

    # Per-lane running max across frame tiles (VMEM scratch, reset per batch element).
    lane_max = jnp.max(s_bark, axis=0, keepdims=True)        # [1, 128]

    @pl.when(t == 0)
    def _():
        max_ref[...] = lane_max

    @pl.when(t != 0)
    def _():
        max_ref[...] = jnp.maximum(max_ref[...], lane_max)

    # ---- epilogue: librosa.amplitude_to_db(S, ref=np.max, amin=1e-5, top_db=80) ----
    # ref is the per-instance max, so max(log_spec) == 0 and the top_db clamp is -80.
    @pl.when(t == n_tiles - 1)
    def _():
        amin = jnp.float32(1e-5)
        ref_db = 20.0 * jnp.log10(jnp.maximum(amin, jnp.max(max_ref[...])))

        def db_tile(s, carry):
            off = pl.multiple_of(s * TF, TF)
            e = out_ref[0, pl.ds(off, TF), :]
            db = 20.0 * jnp.log10(jnp.maximum(amin, e)) - ref_db
            out_ref[0, pl.ds(off, TF), :] = jnp.maximum(db, jnp.float32(-80.0))
            return carry

        lax.fori_loop(0, n_tiles, db_tile, 0)


# ----------------------------------------------------------------------------
# Wrapper
# ----------------------------------------------------------------------------
def bark_forward(feat: jnp.ndarray,
                 fs: int = 16000,
                 n_filts: int = 80,
                 n_fft: int = 512,
                 hop_length: int = 160,
                 window_size: int = 400,
                 tile_frames: int = 512):
    """feat: [B, T] float32 waveform -> (bark_feat [B, n_frames, n_filts], lens [B])."""
    del window_size  # librosa.stft in the reference omits win_length -> defaults to n_fft
    B, T = feat.shape
    hop = hop_length
    n_freq = n_fft // 2                       # Nyquist bin dropped (zero filterbank weight)
    n_parts = -(-n_fft // hop)                # hop-chunks per frame (4 for 512/160)
    n_frames = 1 + T // hop
    n_filts_pad = _round_up(n_filts, 128)     # lane-dense output; padding sliced off below

    # Frame tiling: TF a multiple of EXTRA (=16, covers the n_parts-1 lookahead chunks).
    EXTRA = 16
    assert EXTRA >= n_parts - 1 and hop % 8 == 0
    nF16 = _round_up(n_frames, EXTRA)
    TF = _round_up(min(tile_frames, nF16), EXTRA)
    nF_pad = _round_up(nF16, TF)
    n_tiles = nF_pad // TF
    NC_pad = nF_pad + EXTRA
    # TODO(synk): for very long audio (> ~30k frames) the VMEM-resident [nF_pad, 128]
    # output block outgrows the default scoped VMEM limit - raise vmem_limit_bytes or
    # fall back to a two-pass (energy kernel + dB kernel) variant.

    # --- deterministic parameters (in-script) ---
    fbank = bark_filter_banks(n_filts, n_fft, fs)            # [n_filts, n_fft//2+1]
    # Nyquist column is never written by the triangular construction -> exact to drop.
    assert np.all(fbank[:, n_fft // 2] == 0.0)
    fb_pad = np.zeros((n_freq, n_filts_pad), dtype=np.float32)
    fb_pad[:, :n_filts] = fbank[:, :n_freq].T                # [n_freq, 128]

    basis_full = windowed_dft_basis(n_fft, n_freq)           # [n_fft, 2*n_freq]
    basis_parts = np.zeros((n_parts, hop, 2 * n_freq), dtype=np.float32)
    for j in range(n_parts):
        r0, r1 = j * hop, min(n_fft, (j + 1) * hop)
        basis_parts[j, : r1 - r0, :] = basis_full[r0:r1, :]  # last part zero-padded

    basis_q = jnp.asarray(basis_parts).astype(jnp.bfloat16)
    fb_q = jnp.asarray(fb_pad).astype(jnp.bfloat16)

    # --- waveform -> hop-sized chunk view (no framing gather, no 3.2x HBM expansion) ---
    pad_front = n_fft // 2                                   # librosa center=True, zeros
    total = NC_pad * hop
    wav_pad = jnp.pad(feat.astype(jnp.float32),
                      ((0, 0), (pad_front, total - T - pad_front)))
    chunks = wav_pad.reshape(B, NC_pad, hop)                 # [B, NC_pad, hop] f32

    kernel = functools.partial(_bark_fused_kernel, n_freq=n_freq, n_parts=n_parts,
                               tile_frames=TF, n_tiles=n_tiles)

    def _const_spec(shape):
        # Constant operands: single-buffered (index map never changes).
        idx = lambda b, t, _s=len(shape): (0,) * _s
        try:
            return pl.BlockSpec(shape, idx, pipeline_mode=pl.Buffered(1))
        except TypeError:  # older BlockSpec without pipeline_mode
            return pl.BlockSpec(shape, idx)

    gs = pltpu.PrefetchScalarGridSpec(
        num_scalar_prefetch=0,
        grid=(B, n_tiles),
        in_specs=[
            # main chunks of this frame tile: [t*TF, t*TF+TF)
            pl.BlockSpec((1, TF, hop), lambda b, t: (b, t, 0)),
            # lookahead chunks [t*TF+TF, t*TF+TF+EXTRA) for the last frames of the tile
            pl.BlockSpec((1, EXTRA, hop), lambda b, t: (b, (t + 1) * (TF // EXTRA), 0)),
            _const_spec((n_parts, hop, 2 * n_freq)),
            _const_spec((n_freq, n_filts_pad)),
        ],
        # Whole per-instance output block resident in VMEM across the t axis.
        out_specs=pl.BlockSpec((1, nF_pad, n_filts_pad), lambda b, t: (b, 0, 0)),
        scratch_shapes=[pltpu.VMEM((1, n_filts_pad), jnp.float32)],   # running max
    )
    bark_db = pl.pallas_call(
        kernel,
        out_shape=jax.ShapeDtypeStruct((B, nF_pad, n_filts_pad), jnp.float32),
        grid_spec=gs,
        compiler_params=pltpu.CompilerParams(
            # t must stay "arbitrary": resident output + running max accumulate over it.
            dimension_semantics=("parallel", "arbitrary")),
    )(chunks, chunks, basis_q, fb_q)

    # Trim frame / filter padding in XLA (kept out of the kernel: an 80-lane output
    # block would force masked vst.msk stores).
    bark_feat = bark_db[:, :n_frames, :n_filts]
    output_lens = jnp.full((B,), n_frames, dtype=jnp.int32)  # torch.long -> int32 here
    return bark_feat, output_lens


# ----------------------------------------------------------------------------
# Pure-JAX reference with the same bf16 quantization / f32 accumulation structure
# (validates kernel structure; bf16-vs-f32 drift is an intentional accuracy tradeoff)
# ----------------------------------------------------------------------------
def _bark_ref_bf16(feat, fs=16000, n_filts=80, n_fft=512, hop_length=160):
    hop = hop_length
    n_freq = n_fft // 2
    n_parts = -(-n_fft // hop)
    B, T = feat.shape
    n_frames = 1 + T // hop

    fb = bark_filter_banks(n_filts, n_fft, fs)[:, :n_freq]        # [n_filts, n_freq]
    basis = windowed_dft_basis(n_fft, n_freq)                     # [n_fft, 2*n_freq]

    pad = n_fft // 2
    y = jnp.pad(feat.astype(jnp.float32), ((0, 0), (pad, pad)))
    idx = jnp.arange(n_frames)[:, None] * hop + jnp.arange(n_fft)[None, :]
    frames = y[:, idx]                                            # [B, n_frames, n_fft]

    frames_q = frames.astype(jnp.bfloat16)
    basis_q = jnp.asarray(basis).astype(jnp.bfloat16)
    fb_q = jnp.asarray(fb).astype(jnp.bfloat16)

    # Same K-split accumulation as the kernel (hop-sized bf16 matmuls, f32 accumulation).
    spec = jnp.zeros((B, n_frames, 2 * n_freq), jnp.float32)
    for j in range(n_parts):
        r0, r1 = j * hop, min(n_fft, (j + 1) * hop)
        spec = spec + jnp.einsum("bnf,fk->bnk", frames_q[:, :, r0:r1], basis_q[r0:r1],
                                 preferred_element_type=jnp.float32)

    re, im = spec[..., :n_freq], spec[..., n_freq:]
    power = re * re + im * im
    s_bark = jnp.einsum("bnk,mk->bnm", power.astype(jnp.bfloat16), fb_q,
                        preferred_element_type=jnp.float32)

    amin = jnp.float32(1e-5)
    ref_val = jnp.max(s_bark, axis=(1, 2), keepdims=True)
    log_spec = (20.0 * jnp.log10(jnp.maximum(amin, s_bark))
                - 20.0 * jnp.log10(jnp.maximum(amin, ref_val)))
    return jnp.maximum(log_spec, -80.0)       # ref=max -> top_db clamp is constant -80


if __name__ == "__main__":
    # Small but module-consistent shapes: batch=2, 0.1 s of 16 kHz audio.
    B, T = 2, 1600                     # -> n_frames = 1 + 1600//160 = 11, n_filts = 80
    key = jax.random.PRNGKey(0)
    wav = jax.random.normal(key, (B, T), dtype=jnp.float32)

    bark_feat, lens = bark_forward(wav)
    bark_feat = jax.block_until_ready(bark_feat)
    lens = jax.block_until_ready(lens)

    assert bark_feat.shape == (B, 11, 80), bark_feat.shape
    assert lens.shape == (B,) and int(lens[0]) == 11

    ref = _bark_ref_bf16(wav)
    # dB-domain tolerance; kernel and reference share the bf16 quantization, residual
    # drift is f32 accumulation-order + occasional 1-ulp bf16 rounding flips (<~0.1 dB).
    np.testing.assert_allclose(np.asarray(bark_feat), np.asarray(ref),
                               rtol=1e-3, atol=2e-1)

    print("KERNEL_OK")
</pallas_src>

<mosaic_0001>
module attributes {stable_mosaic.version = 11 : i64} {
  func.func @_bark_fused_kernel(%arg0: i32, %arg1: i32, %arg2: memref<1x16x160xf32, #tpu.memory_space<vmem>>, %arg3: memref<1x16x160xf32, #tpu.memory_space<vmem>>, %arg4: memref<4x160x512xbf16, #tpu.memory_space<vmem>>, %arg5: memref<256x128xbf16, #tpu.memory_space<vmem>>, %arg6: memref<1x16x128xf32, #tpu.memory_space<vmem>>, %arg7: memref<1x128xf32, #tpu.memory_space<vmem>>) attributes {dimension_semantics = [#tpu.dimension_semantics<parallel>, #tpu.dimension_semantics<arbitrary>], iteration_bounds = array<i64: 2, 1>, scalar_prefetch = 0 : i64, scratch_operands = 1 : i64, tpu.core_type = #tpu.core_type<tc>, window_params = [{transform_indices = @transform_0, window_bounds = array<i64: 1, 16, 160>}, {transform_indices = @transform_1, window_bounds = array<i64: 1, 16, 160>}, {pipeline_mode = #tpu.pipeline_mode<synchronous>, transform_indices = @transform_2, window_bounds = array<i64: 4, 160, 512>}, {pipeline_mode = #tpu.pipeline_mode<synchronous>, transform_indices = @transform_3, window_bounds = array<i64: 256, 128>}, {transform_indices = @transform_4, window_bounds = array<i64: 1, 16, 128>}]} {
    %c0 = arith.constant 0 : index
    %c0_0 = arith.constant 0 : index
    %c0_1 = arith.constant 0 : index
    %0 = vector.load %arg2[%c0, %c0_0, %c0_1] : memref<1x16x160xf32, #tpu.memory_space<vmem>>, vector<1x16x160xf32>
    %1 = vector.shape_cast %0 : vector<1x16x160xf32> to vector<16x160xf32>
    %c0_2 = arith.constant 0 : index
    %c0_3 = arith.constant 0 : index
    %c0_4 = arith.constant 0 : index
    %2 = vector.load %arg3[%c0_2, %c0_3, %c0_4] : memref<1x16x160xf32, #tpu.memory_space<vmem>>, vector<1x16x160xf32>
    %3 = vector.shape_cast %2 : vector<1x16x160xf32> to vector<16x160xf32>
    %4 = tpu.concatenate %1, %3 in 0 : vector<16x160xf32>, vector<16x160xf32> -> vector<32x160xf32>
    %5 = vector.extract_strided_slice %4 {offsets = [0, 0], sizes = [16, 160], strides = [1, 1]} : vector<32x160xf32> to vector<16x160xf32>
    %6 = arith.truncf %5 : vector<16x160xf32> to vector<16x160xbf16>
    %c0_5 = arith.constant 0 : index
    %c0_6 = arith.constant 0 : index
    %c0_7 = arith.constant 0 : index
    %7 = vector.load %arg4[%c0_5, %c0_6, %c0_7] : memref<4x160x512xbf16, #tpu.memory_space<vmem>>, vector<1x160x512xbf16>
    %8 = vector.shape_cast %7 : vector<1x160x512xbf16> to vector<160x512xbf16>
    %cst = arith.constant dense<0.000000e+00> : vector<16x512xf32>
    %9 = tpu.matmul %6, %8, %cst {dimension_numbers = #tpu.dot_dimension_numbers<[1], [0], [0], [1], [0, 0, 1, 1], [], []>} : vector<16x160xbf16>, vector<160x512xbf16>, vector<16x512xf32> -> vector<16x512xf32>
    %10 = vector.extract_strided_slice %4 {offsets = [1, 0], sizes = [16, 160], strides = [1, 1]} : vector<32x160xf32> to vector<16x160xf32>
    %11 = arith.truncf %10 : vector<16x160xf32> to vector<16x160xbf16>
    %c1 = arith.constant 1 : index
    %c0_8 = arith.constant 0 : index
    %c0_9 = arith.constant 0 : index
    %12 = vector.load %arg4[%c1, %c0_8, %c0_9] : memref<4x160x512xbf16, #tpu.memory_space<vmem>>, vector<1x160x512xbf16>
    %13 = vector.shape_cast %12 : vector<1x160x512xbf16> to vector<160x512xbf16>
    %cst_10 = arith.constant dense<0.000000e+00> : vector<16x512xf32>
    %14 = tpu.matmul %11, %13, %cst_10 {dimension_numbers = #tpu.dot_dimension_numbers<[1], [0], [0], [1], [0, 0, 1, 1], [], []>} : vector<16x160xbf16>, vector<160x512xbf16>, vector<16x512xf32> -> vector<16x512xf32>
    %15 = arith.addf %9, %14 : vector<16x512xf32>
    %16 = vector.extract_strided_slice %4 {offsets = [2, 0], sizes = [16, 160], strides = [1, 1]} : vector<32x160xf32> to vector<16x160xf32>
    %17 = arith.truncf %16 : vector<16x160xf32> to vector<16x160xbf16>
    %c2 = arith.constant 2 : index
    %c0_11 = arith.constant 0 : index
    %c0_12 = arith.constant 0 : index
    %18 = vector.load %arg4[%c2, %c0_11, %c0_12] : memref<4x160x512xbf16, #tpu.memory_space<vmem>>, vector<1x160x512xbf16>
    %19 = vector.shape_cast %18 : vector<1x160x512xbf16> to vector<160x512xbf16>
    %cst_13 = arith.constant dense<0.000000e+00> : vector<16x512xf32>
    %20 = tpu.matmul %17, %19, %cst_13 {dimension_numbers = #tpu.dot_dimension_numbers<[1], [0], [0], [1], [0, 0, 1, 1], [], []>} : vector<16x160xbf16>, vector<160x512xbf16>, vector<16x512xf32> -> vector<16x512xf32>
    %21 = arith.addf %15, %20 : vector<16x512xf32>
    %22 = vector.extract_strided_slice %4 {offsets = [3, 0], sizes = [16, 160], strides = [1, 1]} : vector<32x160xf32> to vector<16x160xf32>
    %23 = arith.truncf %22 : vector<16x160xf32> to vector<16x160xbf16>
    %c3 = arith.constant 3 : index
    %c0_14 = arith.constant 0 : index
    %c0_15 = arith.constant 0 : index
    %24 = vector.load %arg4[%c3, %c0_14, %c0_15] : memref<4x160x512xbf16, #tpu.memory_space<vmem>>, vector<1x160x512xbf16>
    %25 = vector.shape_cast %24 : vector<1x160x512xbf16> to vector<160x512xbf16>
    %cst_16 = arith.constant dense<0.000000e+00> : vector<16x512xf32>
    %26 = tpu.matmul %23, %25, %cst_16 {dimension_numbers = #tpu.dot_dimension_numbers<[1], [0], [0], [1], [0, 0, 1, 1], [], []>} : vector<16x160xbf16>, vector<160x512xbf16>, vector<16x512xf32> -> vector<16x512xf32>
    %27 = arith.addf %21, %26 : vector<16x512xf32>
    %28 = vector.extract_strided_slice %27 {offsets = [0, 0], sizes = [16, 256], strides = [1, 1]} : vector<16x512xf32> to vector<16x256xf32>
    %29 = vector.extract_strided_slice %27 {offsets = [0, 256], sizes = [16, 256], strides = [1, 1]} : vector<16x512xf32> to vector<16x256xf32>
    %30 = arith.mulf %28, %28 : vector<16x256xf32>
    %31 = arith.mulf %29, %29 : vector<16x256xf32>
    %32 = arith.addf %30, %31 : vector<16x256xf32>
    %33 = arith.truncf %32 : vector<16x256xf32> to vector<16x256xbf16>
    %c0_17 = arith.constant 0 : index
    %c0_18 = arith.constant 0 : index
    %34 = vector.load %arg5[%c0_17, %c0_18] : memref<256x128xbf16, #tpu.memory_space<vmem>>, vector<256x128xbf16>
    %cst_19 = arith.constant dense<0.000000e+00> : vector<16x128xf32>
    %35 = tpu.matmul %33, %34, %cst_19 {dimension_numbers = #tpu.dot_dimension_numbers<[1], [0], [0], [1], [0, 0, 1, 1], [], []>} : vector<16x256xbf16>, vector<256x128xbf16>, vector<16x128xf32> -> vector<16x128xf32>
    %c16_i32 = arith.constant 16 : i32
    %36 = arith.muli %arg1, %c16_i32 : i32
    %37 = tpu.assume_multiple %36, 16 : i32
    %c0_20 = arith.constant 0 : index
    %38 = arith.index_cast %37 : i32 to index
    %c0_21 = arith.constant 0 : index
    %39 = vector.load %arg6[%c0_20, %38, %c0_21] : memref<1x16x128xf32, #tpu.memory_space<vmem>>, vector<1x16x128xf32>
    %40 = vector.shape_cast %39 : vector<1x16x128xf32> to vector<16x128xf32>
    %41 = vector.shape_cast %35 : vector<16x128xf32> to vector<1x16x128xf32>
    tpu.vector_store %arg6[%c0_20, %38, %c0_21], %41 {strides = array<i32>} : memref<1x16x128xf32, #tpu.memory_space<vmem>>, vector<1x16x128xf32>,
    %cst_22 = arith.constant dense<0xFF800000> : vector<128xf32>
    %42 = vector.multi_reduction <maximumf>, %35, %cst_22 [0] : vector<16x128xf32> to vector<128xf32>
    %43 = vector.shape_cast %42 : vector<128xf32> to vector<1x128xf32>
    %c0_i32 = arith.constant 0 : i32
    %44 = arith.cmpi eq, %arg1, %c0_i32 : i32
    %45 = arith.extui %44 : i1 to i32
    %c0_i32_23 = arith.constant 0 : i32
    %46 = arith.cmpi ne, %45, %c0_i32_23 : i32
    scf.if %46 {
      %c0_28 = arith.constant 0 : index
      %c0_29 = arith.constant 0 : index
      %53 = vector.load %arg7[%c0_28, %c0_29] : memref<1x128xf32, #tpu.memory_space<vmem>>, vector<1x128xf32>
      tpu.vector_store %arg7[%c0_28, %c0_29], %43 {strides = array<i32>} : memref<1x128xf32, #tpu.memory_space<vmem>>, vector<1x128xf32>,
    } else {
    }
    %c0_i32_24 = arith.constant 0 : i32
    %47 = arith.cmpi ne, %arg1, %c0_i32_24 : i32
    %48 = arith.extui %47 : i1 to i32
    %c0_i32_25 = arith.constant 0 : i32
    %49 = arith.cmpi ne, %48, %c0_i32_25 : i32
    scf.if %49 {
      %c0_28 = arith.constant 0 : index
      %c0_29 = arith.constant 0 : index
      %53 = vector.load %arg7[%c0_28, %c0_29] : memref<1x128xf32, #tpu.memory_space<vmem>>, vector<1x128xf32>
      %54 = arith.maximumf %53, %43 : vector<1x128xf32>
      %c0_30 = arith.constant 0 : index
      %c0_31 = arith.constant 0 : index
      %55 = vector.load %arg7[%c0_30, %c0_31] : memref<1x128xf32, #tpu.memory_space<vmem>>, vector<1x128xf32>
      tpu.vector_store %arg7[%c0_30, %c0_31], %54 {strides = array<i32>} : memref<1x128xf32, #tpu.memory_space<vmem>>, vector<1x128xf32>,
    } else {
    }
    %c0_i32_26 = arith.constant 0 : i32
    %50 = arith.cmpi eq, %arg1, %c0_i32_26 : i32
    %51 = arith.extui %50 : i1 to i32
    %c0_i32_27 = arith.constant 0 : i32
    %52 = arith.cmpi ne, %51, %c0_i32_27 : i32
    scf.if %52 {
      %c0_28 = arith.constant 0 : index
      %c0_29 = arith.constant 0 : index
      %53 = vector.load %arg7[%c0_28, %c0_29] : memref<1x128xf32, #tpu.memory_space<vmem>>, vector<1x128xf32>
      %54 = vector.shape_cast %53 : vector<1x128xf32> to vector<1x1x128xf32>
      %cst_30 = arith.constant dense<0xFF800000> : vector<1xf32>
      %55 = vector.multi_reduction <maximumf>, %54, %cst_30 [1, 2] : vector<1x1x128xf32> to vector<1xf32>
      %56 = vector.shape_cast %55 : vector<1xf32> to vector<1x1x1xf32>
      %57 = vector.extract %56[0, 0, 0] : f32 from vector<1x1x1xf32>
      %cst_31 = arith.constant 9.99999974E-6 : f32
      %58 = arith.maximumf %cst_31, %57 : f32
      %59 = math.log %58 : f32
      %cst_32 = arith.constant 0.434294492 : f32
      %60 = arith.mulf %59, %cst_32 : f32
      %cst_33 = arith.constant 2.000000e+01 : f32
      %61 = arith.mulf %cst_33, %60 : f32
      %cst_34 = arith.constant 9.99999974E-6 : f32
      %c0_i32_35 = arith.constant 0 : i32
      %c16_i32_36 = arith.constant 16 : i32
      %62 = arith.muli %c0_i32_35, %c16_i32_36 : i32
      %63 = tpu.assume_multiple %62, 16 : i32
      %c0_37 = arith.constant 0 : index
      %64 = arith.index_cast %63 : i32 to index
      %c0_38 = arith.constant 0 : index
      %65 = vector.load %arg6[%c0_37, %64, %c0_38] : memref<1x16x128xf32, #tpu.memory_space<vmem>>, vector<1x16x128xf32>
      %66 = vector.shape_cast %65 : vector<1x16x128xf32> to vector<16x128xf32>
      %67 = vector.broadcast %cst_34 : f32 to vector<16x128xf32>
      %68 = arith.maximumf %67, %66 : vector<16x128xf32>
      %69 = math.log %68 : vector<16x128xf32>
      %cst_39 = arith.constant 0.434294492 : f32
      %70 = vector.broadcast %cst_39 : f32 to vector<16x128xf32>
      %71 = arith.mulf %69, %70 : vector<16x128xf32>
      %cst_40 = arith.constant 2.000000e+01 : f32
      %72 = vector.broadcast %cst_40 : f32 to vector<16x128xf32>
      %73 = arith.mulf %72, %71 : vector<16x128xf32>
      %74 = vector.broadcast %61 : f32 to vector<16x128xf32>
      %75 = arith.subf %73, %74 : vector<16x128xf32>
      %cst_41 = arith.constant -8.000000e+01 : f32
      %76 = vector.broadcast %cst_41 : f32 to vector<16x128xf32>
      %77 = arith.maximumf %75, %76 : vector<16x128xf32>
      %c0_42 = arith.constant 0 : index
      %78 = arith.index_cast %63 : i32 to index
      %c0_43 = arith.constant 0 : index
      %79 = vector.load %arg6[%c0_42, %78, %c0_43] : memref<1x16x128xf32, #tpu.memory_space<vmem>>, vector<1x16x128xf32>
      %80 = vector.shape_cast %79 : vector<1x16x128xf32> to vector<16x128xf32>
      %81 = vector.shape_cast %77 : vector<16x128xf32> to vector<1x16x128xf32>
      tpu.vector_store %arg6[%c0_42, %78, %c0_43], %81 {strides = array<i32>} : memref<1x16x128xf32, #tpu.memory_space<vmem>>, vector<1x16x128xf32>,
      %c1_i32 = arith.constant 1 : i32
    } else {
    }
    return
  }
  func.func @transform_0(%arg0: i32, %arg1: i32) -> (i32, i32, i32) {
    %c0_i32 = arith.constant 0 : i32
    %c0_i32_0 = arith.constant 0 : i32
    return %arg0, %arg1, %c0_i32 : i32, i32, i32
  }
  func.func @transform_1(%arg0: i32, %arg1: i32) -> (i32, i32, i32) {
    %c1_i32 = arith.constant 1 : i32
    %0 = arith.addi %arg1, %c1_i32 : i32
    %c1_i32_0 = arith.constant 1 : i32
    %1 = arith.muli %0, %c1_i32_0 : i32
    %c0_i32 = arith.constant 0 : i32
    %c0_i32_1 = arith.constant 0 : i32
    return %arg0, %1, %c0_i32 : i32, i32, i32
  }
  func.func @transform_2(%arg0: i32, %arg1: i32) -> (i32, i32, i32) {
    %c0_i32 = arith.constant 0 : i32
    %c0_i32_0 = arith.constant 0 : i32
    %c0_i32_1 = arith.constant 0 : i32
    %c0_i32_2 = arith.constant 0 : i32
    return %c0_i32, %c0_i32_0, %c0_i32_1 : i32, i32, i32
  }
  func.func @transform_3(%arg0: i32, %arg1: i32) -> (i32, i32) {
    %c0_i32 = arith.constant 0 : i32
    %c0_i32_0 = arith.constant 0 : i32
    %c0_i32_1 = arith.constant 0 : i32
    return %c0_i32, %c0_i32_0 : i32, i32
  }
  func.func @transform_4(%arg0: i32, %arg1: i32) -> (i32, i32, i32) {
    %c0_i32 = arith.constant 0 : i32
    %c0_i32_0 = arith.constant 0 : i32
    %c0_i32_1 = arith.constant 0 : i32
    return %arg0, %c0_i32, %c0_i32_0 : i32, i32, i32
  }
}

</mosaic_0001>

<llo_original>
// kernel: tpu_custom_call.1
$region0: #{tpu_custom_call.1}
  #allocation0 [shape = 'u32[]', space=smem, size = 0x4, offset = 0x4, fixed_abs, tag = 'smem constant byte address 0x4 - core index']
  #allocation1 [shape = 'u32[144,128]{1,0:T(1,128)}', space=vmem, size = 0x12000, scoped, tag = 'internal scratch']
  #allocation2 [shape = 'f32[1,128]{1,0:T(1,128)}', space=vmem, size = 0x200, scoped, tag = 'scratch operand']
  %s0 = inlined_call_operand.hbm [shape: f32[2,32,160], index: 0, kind: input, shape index: {}]
  %s1 = inlined_call_operand.hbm [shape: f32[2,32,160], index: 1, kind: input, shape index: {}]
  %s2 = inlined_call_operand.hbm [shape: bf16[4,160,512], index: 2, kind: input, shape index: {}]
  %s3 = inlined_call_operand.hbm [shape: bf16[256,128], index: 3, kind: input, shape index: {}]
  %s4 = inlined_call_operand.hbm [shape: f32[2,16,128], index: 4, kind: output, shape index: {}]
  %s5 = sld [smem:[#allocation0]]
  $region77: #{tpu_custom_call.1} parent=0
    _
  %s7 = ssub.s32 1, %s5
  %s8 = scalar_select 0, %s7, %s5
  $region1: #{tpu_custom_call.1} parent=0
    #allocation3 [shape = 'u8[32768]{0}', space=vmem, size = 0x8000, scoped, tag = 'input window, operand 0']
    #allocation4 [shape = 's32[2]{0}', space=sflag, size = 0x8, scoped, tag = 'scoped memory for tpu_custom_call.1']
    #allocation5 [shape = 's32[2]{0}', space=sflag, size = 0x8, scoped, tag = 'scoped memory for tpu_custom_call.1']
    #allocation6 [shape = 'u8[32768]{0}', space=vmem, size = 0x8000, scoped, tag = 'input window, operand 1']
    #allocation7 [shape = 's32[2]{0}', space=sflag, size = 0x8, scoped, tag = 'scoped memory for tpu_custom_call.1']
    #allocation8 [shape = 'u8[655360]{0}', space=vmem, size = 0xa0000, scoped, tag = 'input window, operand 2, single buffered']
    #allocation9 [shape = 'u8[65536]{0}', space=vmem, size = 0x10000, scoped, tag = 'input window, operand 3, single buffered']
    #allocation10 [shape = 's32[1]{0}', space=sflag, size = 0x4, scoped, tag = 'scoped memory for tpu_custom_call.1']
    #allocation11 [shape = 'u8[16384]{0}', space=vmem, size = 0x4000, scoped, tag = 'output window, operand 0']
    %9 = vsyncpa [#allocation4], 0
    %s10 = scalar_lea.sflag [#allocation4], 1
    %11 = vsyncpa %s10, 0
    %12 = vsyncpa [#allocation7], 0
    %s13 = scalar_lea.sflag [#allocation7], 1
    %14 = vsyncpa %s13, 0
    %15 = vsyncpa [#allocation10], 0
    %16 = vsyncpa [#allocation5], 0
    %s17 = scalar_lea.sflag [#allocation5], 1
    %18 = vsyncpa %s17, 0
    loop: start=0, step=1, limit=4
    $region2: #{tpu_custom_call.1} parent=1 // loop_pre_header
      _
    $region3: #{tpu_custom_call.1} parent=1 // loop_header
      %s20 = sphi 0, %s24
      %p21 = scmp.ge.s32.totalorder %s20, 4
      %s27 = sphi 0, %s39
      %s28 = sphi 0, %s35
      %s29 = sphi 0, %s27
      %s30 = sphi 0, %s28
      %s31 = sphi 0, %s29
      %s32 = sphi 0, %s30
      %s44 = sphi 0, %s46
      %s47 = sphi 0, %s44
      %s48 = sphi 0, %s47
      %s64 = sphi 0, %s48
      %s74 = sphi 0, %s76
      %s77 = sphi 0, %s74
      %s78 = sphi 0, %s77
      %s94 = sphi 0, %s78
      %s98 = sphi 0, %s98
      %s100 = sphi 0, %s98
      %s101 = sphi 0, %s100
      %s115 = sphi 0, %s101
      %s119 = sphi 0, %s119
      %s121 = sphi 0, %s119
      %s122 = sphi 0, %s121
      %s136 = sphi 0, %s122
      %s142 = sphi 0, %s144
      %s145 = sphi 0, %s142
      %s146 = sphi 0, %s145
      %s162 = sphi 0, %s146
    $region4: #{tpu_custom_call.1} parent=1 // loop_header_branch
      %23 = sbr.rel (%p21) target = $region8
    $region5: #{tpu_custom_call.1} parent=1 // loop_body
      %s25 = ssub.s32 %s20, 1
      %s26 = ssub.s32 %s20, 2
      %s33 = sadd.s32 1, %s28
      %p34 = scmp.ge.s32.totalorder %s33, 1
      %s35 = scalar_select %p34, 0, %s33
      %s36 = sadd.s32 1, %s27
      %s37 = scalar_select %p34, %s36, %s27
      %p38 = scmp.ge.s32.totalorder %s37, 2
      %s39 = scalar_select %p38, 0, %s37
      %s40 = ssub.s32 %s27, %s39
      %s41 = ssub.s32 %s28, %s35
      %s42 = sor.u32 %s40, %s41
      %p43 = scmp.eq.s32.totalorder %s42, 0
      %s45 = sadd.s32 %s44, 1
      %s46 = scalar_select %p43, %s44, %s45
      %p49 = pneg %p43
      %p50 = scmp.eq.s32.totalorder %s20, 1
      %p51 = por %p49, %p50
      %p52 = scmp.ne.s32.totalorder %s44, %s47
      %p53 = scmp.eq.s32.totalorder %s20, 0
      %p54 = por %p52, %p53
      %p55 = scmp.ne.s32.totalorder %s44, %s47
      %p56 = scmp.eq.s32.totalorder %s25, 1
      %p57 = por %p55, %p56
      %p58 = scmp.ne.s32.totalorder %s47, %s48
      %p59 = scmp.eq.s32.totalorder %s25, 0
      %p60 = por %p58, %p59
      %p61 = scmp.ne.s32.totalorder %s47, %s48
      %p62 = scmp.eq.s32.totalorder %s26, 1
      %p63 = por %p61, %p62
      %p65 = scmp.ne.s32.totalorder %s48, %s64
      %p66 = scmp.eq.s32.totalorder %s26, 0
      %p67 = por %p65, %p66
      %s68 = sadd.s32 %s28, 1
      %s69 = sadd.s32 %s35, 1
      %s70 = ssub.s32 %s27, %s39
      %s71 = ssub.s32 %s68, %s69
      %s72 = sor.u32 %s70, %s71
      %p73 = scmp.eq.s32.totalorder %s72, 0
      %s75 = sadd.s32 %s74, 1
      %s76 = scalar_select %p73, %s74, %s75
      %p79 = pneg %p73
      %p80 = scmp.eq.s32.totalorder %s20, 1
      %p81 = por %p79, %p80
      %p82 = scmp.ne.s32.totalorder %s74, %s77
      %p83 = scmp.eq.s32.totalorder %s20, 0
      %p84 = por %p82, %p83
      %p85 = scmp.ne.s32.totalorder %s74, %s77
      %p86 = scmp.eq.s32.totalorder %s25, 1
      %p87 = por %p85, %p86
      %p88 = scmp.ne.s32.totalorder %s77, %s78
      %p89 = scmp.eq.s32.totalorder %s25, 0
      %p90 = por %p88, %p89
      %p91 = scmp.ne.s32.totalorder %s77, %s78
      %p92 = scmp.eq.s32.totalorder %s26, 1
      %p93 = por %p91, %p92
      %p95 = scmp.ne.s32.totalorder %s78, %s94
      %p96 = scmp.eq.s32.totalorder %s26, 0
      %p97 = por %p95, %p96
      %s99 = sadd.s32 %s98, 1
      %p102 = scmp.eq.s32.totalorder %s20, 1
      %p103 = scmp.ne.s32.totalorder %s98, %s100
      %p104 = scmp.eq.s32.totalorder %s20, 0
      %p105 = por %p103, %p104
      %p106 = scmp.ne.s32.totalorder %s98, %s100
      %p107 = scmp.eq.s32.totalorder %s25, 1
      %p108 = por %p106, %p107
      %p109 = scmp.ne.s32.totalorder %s100, %s101
      %p110 = scmp.eq.s32.totalorder %s25, 0
      %p111 = por %p109, %p110
      %p112 = scmp.ne.s32.totalorder %s100, %s101
      %p113 = scmp.eq.s32.totalorder %s26, 1
      %p114 = por %p112, %p113
      %p116 = scmp.ne.s32.totalorder %s101, %s115
      %p117 = scmp.eq.s32.totalorder %s26, 0
      %p118 = por %p116, %p117
      %s120 = sadd.s32 %s119, 1
      %p123 = scmp.eq.s32.totalorder %s20, 1
      %p124 = scmp.ne.s32.totalorder %s119, %s121
      %p125 = scmp.eq.s32.totalorder %s20, 0
      %p126 = por %p124, %p125
      %p127 = scmp.ne.s32.totalorder %s119, %s121
      %p128 = scmp.eq.s32.totalorder %s25, 1
      %p129 = por %p127, %p128
      %p130 = scmp.ne.s32.totalorder %s121, %s122
      %p131 = scmp.eq.s32.totalorder %s25, 0
      %p132 = por %p130, %p131
      %p133 = scmp.ne.s32.totalorder %s121, %s122
      %p134 = scmp.eq.s32.totalorder %s26, 1
      %p135 = por %p133, %p134
      %p137 = scmp.ne.s32.totalorder %s122, %s136
      %p138 = scmp.eq.s32.totalorder %s26, 0
      %p139 = por %p137, %p138
      %s140 = ssub.s32 %s27, %s39
      %p141 = scmp.eq.s32.totalorder %s140, 0
      %s143 = sadd.s32 %s142, 1
      %s144 = scalar_select %p141, %s142, %s143
      %p147 = pneg %p141
      %p148 = scmp.eq.s32.totalorder %s20, 1
      %p149 = por %p147, %p148
      %p150 = scmp.ne.s32.totalorder %s142, %s145
      %p151 = scmp.eq.s32.totalorder %s20, 0
      %p152 = por %p150, %p151
      %p153 = scmp.ne.s32.totalorder %s142, %s145
      %p154 = scmp.eq.s32.totalorder %s25, 1
      %p155 = por %p153, %p154
      %p156 = scmp.ne.s32.totalorder %s145, %s146
      %p157 = scmp.eq.s32.totalorder %s25, 0
      %p158 = por %p156, %p157
      %p159 = scmp.ne.s32.totalorder %s145, %s146
      %p160 = scmp.eq.s32.totalorder %s26, 1
      %p161 = por %p159, %p160
      %p163 = scmp.ne.s32.totalorder %s146, %s162
      %p164 = scmp.eq.s32.totalorder %s26, 0
      %p165 = por %p163, %p164
      %p166 = scmp.le.s32.totalorder 1, %s20
      %p167 = scmp.lt.s32.totalorder %s20, 3
      %p168 = pnand %p166, %p167
      %p169 = pneg %p168
      // Predicated region
      $region9: #{tpu_custom_call.1} parent=5 // pred_check
        _
      $region10: #{tpu_custom_call.1} parent=5 // pred_check_branch
        %171 = sbr.rel (%p168) target = $region12
      $region11: #{tpu_custom_call.1} parent=5 // pred_region
        %s172 = ssub.s32 %s20, 1
        // Predicated region
        $region13: #{tpu_custom_call.1} parent=11 // pred_check
          %p173 = pneg %p111
        $region14: #{tpu_custom_call.1} parent=11 // pred_check_branch
          %175 = sbr.rel (%p173) target = $region16
        $region15: #{tpu_custom_call.1} parent=11 // pred_region
          %s177 = ssub.s32 20480, 20480
          %178 = vsyncadd [#allocation7], %s177
          %s179 = sshll.u32 [#allocation8], 4
          %s180 = int_to_ptr.vmem [resolvable:$true] %s179
          %185 = dma.hbm_to_vmem [thread:$0]  %s2, 20480, %s180, [#allocation7], 256, 256, 16
        $region16: #{tpu_custom_call.1} parent=11 // pred_fallthru
          _
        // Predicated region
        $region17: #{tpu_custom_call.1} parent=11 // pred_check
          %p186 = pneg %p132
        $region18: #{tpu_custom_call.1} parent=11 // pred_check_branch
          %188 = sbr.rel (%p186) target = $region20
        $region19: #{tpu_custom_call.1} parent=11 // pred_region
          %s190 = ssub.s32 2048, 2048
          %191 = vsyncadd [#allocation10], %s190
          %s192 = sshll.u32 [#allocation9], 4
          %s193 = int_to_ptr.vmem [resolvable:$true] %s192
          %198 = dma.hbm_to_vmem [thread:$0]  %s3, 2048, %s193, [#allocation10], 64, 64, 4
        $region20: #{tpu_custom_call.1} parent=11 // pred_fallthru
          _
      $region12: #{tpu_custom_call.1} parent=5 // pred_fallthru
        _
      %p199 = scmp.lt.s32.totalorder %s20, 2
      // Predicated region
      $region21: #{tpu_custom_call.1} parent=5 // pred_check
        %p200 = pneg %p199
      $region22: #{tpu_custom_call.1} parent=5 // pred_check_branch
        %202 = sbr.rel (%p200) target = $region24
      $region23: #{tpu_custom_call.1} parent=5 // pred_region
        // Predicated region
        $region25: #{tpu_custom_call.1} parent=23 // pred_check
          %p203 = pneg %p54
        $region26: #{tpu_custom_call.1} parent=23 // pred_check_branch
          %205 = sbr.rel (%p203) target = $region28
        $region27: #{tpu_custom_call.1} parent=23 // pred_region
          %s206 = sand.u32 %s44, 1
          %s207 = scalar_lea.sflag [#allocation4], %s206
          %s208 = sand.u32 %s44, 1
          %s209 = smul.addr %s208, 32
          %s210 = scalar_lea.vmem [#allocation3], %s209
          %s211 = smul.u32 2, %s28
          %s213 = ssub.s32 512, 512
          %214 = vsyncadd %s207, %s213
          %s215 = smul.addr %s211, 2
          %s216 = smul.addr %s27, 8
          %s217 = sadd.s32 %s215, %s216
          %s218 = smul.addr %s217, 128
          %s219 = scalar_lea.hbm %s0, %s218
          %s220 = sshll.u32 %s210, 4
          %s221 = int_to_ptr.vmem [resolvable:$true] %s220
          %226 = dma.hbm_to_vmem [thread:$0]  %s219, 512, %s221, %s207, 256, 256, 16
        $region28: #{tpu_custom_call.1} parent=23 // pred_fallthru
          _
        // Predicated region
        $region29: #{tpu_custom_call.1} parent=23 // pred_check
          %p227 = pneg %p84
        $region30: #{tpu_custom_call.1} parent=23 // pred_check_branch
          %229 = sbr.rel (%p227) target = $region32
        $region31: #{tpu_custom_call.1} parent=23 // pred_region
          %s230 = sand.u32 %s20, 1
          %s231 = scalar_lea.sflag [#allocation7], %s230
          %s232 = sand.u32 %s74, 1
          %s233 = smul.addr %s232, 32
          %s234 = scalar_lea.vmem [#allocation6], %s233
          %s235 = sadd.s32 %s28, 1
          %s236 = smul.u32 2, %s235
          %s238 = ssub.s32 512, 512
          %239 = vsyncadd %s231, %s238
          %s240 = smul.addr %s236, 2
          %s241 = smul.addr %s27, 8
          %s242 = sadd.s32 %s240, %s241
          %s243 = smul.addr %s242, 128
          %s244 = scalar_lea.hbm %s1, %s243
          %s245 = sshll.u32 %s234, 4
          %s246 = int_to_ptr.vmem [resolvable:$true] %s245
          %251 = dma.hbm_to_vmem [thread:$0]  %s244, 512, %s246, %s231, 256, 256, 16
        $region32: #{tpu_custom_call.1} parent=23 // pred_fallthru
          _
      $region24: #{tpu_custom_call.1} parent=5 // pred_fallthru
        _
      %p252 = scmp.le.s32.totalorder 1, %s20
      %p253 = scmp.lt.s32.totalorder %s20, 3
      %p254 = pnand %p252, %p253
      %p255 = pneg %p254
      // Predicated region
      $region33: #{tpu_custom_call.1} parent=5 // pred_check
        _
      $region34: #{tpu_custom_call.1} parent=5 // pred_check_branch
        %257 = sbr.rel (%p254) target = $region36
      $region35: #{tpu_custom_call.1} parent=5 // pred_region
        %s258 = ssub.s32 %s20, 1
        %s259 = sand.u32 %s47, 1
        %s260 = scalar_lea.sflag [#allocation4], %s259
        %s261 = sand.u32 %s47, 1
        %s262 = smul.addr %s261, 32
        %s263 = scalar_lea.vmem [#allocation3], %s262
        // Predicated region
        $region37: #{tpu_custom_call.1} parent=35 // pred_check
          %p264 = pneg %p60
        $region38: #{tpu_custom_call.1} parent=35 // pred_check_branch
          %266 = sbr.rel (%p264) target = $region40
        $region39: #{tpu_custom_call.1} parent=35 // pred_region
          %267 = dma.done %s260, 512
        $region40: #{tpu_custom_call.1} parent=35 // pred_fallthru
          _
        %s268 = sand.u32 %s25, 1
        %s269 = scalar_lea.sflag [#allocation7], %s268
        %s270 = sand.u32 %s77, 1
        %s271 = smul.addr %s270, 32
        %s272 = scalar_lea.vmem [#allocation6], %s271
        // Predicated region
        $region41: #{tpu_custom_call.1} parent=35 // pred_check
          %p273 = pneg %p90
        $region42: #{tpu_custom_call.1} parent=35 // pred_check_branch
          %275 = sbr.rel (%p273) target = $region44
        $region43: #{tpu_custom_call.1} parent=35 // pred_region
          %276 = dma.done %s269, 512
        $region44: #{tpu_custom_call.1} parent=35 // pred_fallthru
          _
        // Predicated region
        $region45: #{tpu_custom_call.1} parent=35 // pred_check
          %p277 = pneg %p111
        $region46: #{tpu_custom_call.1} parent=35 // pred_check_branch
          %279 = sbr.rel (%p277) target = $region48
        $region47: #{tpu_custom_call.1} parent=35 // pred_region
          %280 = dma.done [#allocation7], 20480
        $region48: #{tpu_custom_call.1} parent=35 // pred_fallthru
          _
        // Predicated region
        $region49: #{tpu_custom_call.1} parent=35 // pred_check
          %p281 = pneg %p132
        $region50: #{tpu_custom_call.1} parent=35 // pred_check_branch
          %283 = sbr.rel (%p281) target = $region52
        $region51: #{tpu_custom_call.1} parent=35 // pred_region
          %284 = dma.done [#allocation10], 2048
        $region52: #{tpu_custom_call.1} parent=35 // pred_fallthru
          _
        %s285 = sand.u32 %s47, 1
        %s286 = scalar_lea.sflag [#allocation4], %s285
        %s287 = sand.u32 %s47, 1
        %s288 = smul.addr %s287, 32
        %s289 = scalar_lea.vmem [#allocation3], %s288
        %p290 = pneg %p60
        %p291 = pneg %p57
        %s292 = sand.u32 %s25, 1
        %s293 = scalar_lea.sflag [#allocation7], %s292
        %s294 = sand.u32 %s77, 1
        %s295 = smul.addr %s294, 32
        %s296 = scalar_lea.vmem [#allocation6], %s295
        %p297 = pneg %p90
        %p298 = pneg %p87
        %p299 = pneg %p111
        %p300 = pneg %p108
        %p301 = pneg %p132
        %p302 = pneg %p129
        %p303 = pneg %p158
        %p304 = pneg %p155
        %s305 = sand.u32 %s145, 1
        %s306 = scalar_lea.sflag [#allocation5], %s305
        %s307 = sand.u32 %s145, 1
        %s308 = smul.addr %s307, 16
        %s309 = scalar_lea.vmem [#allocation11], %s308
        %s310 = smul.u32 2, %s30
        %s311 = sadd.s32 %s30, 1
        %s312 = smul.u32 2, %s311
        %v314 = vld [vmem:[%s263] sm:$0xff]
        %v315 = vld [vmem:[%s263 + $0x8] sm:$0xff]
        %v316 = vld [vmem:[%s263 + $0x10] sm:$0xff]
        %v317 = vld [vmem:[%s263 + $0x18] sm:$0xff]
        %v318 = vld [vmem:[%s272] sm:$0xff]
        %v319 = vld [vmem:[%s272 + $0x8] sm:$0xff]
        %v320 = vpack.c.bf16 %v316, %v314
        %v321 = vpack.c.bf16 %v317, %v315
        %v322 = vld [vmem:[#allocation8] sm:$0xff]
        %v323 = vld [vmem:[#allocation8 + $0x8] sm:$0xff]
        %v324 = vld [vmem:[#allocation8 + $0x10] sm:$0xff]
        %v325 = vld [vmem:[#allocation8 + $0x18] sm:$0xff]
        %v326 = vld [vmem:[#allocation8 + $0x20] sm:$0xff]
        %v327 = vld [vmem:[#allocation8 + $0x28] sm:$0xff]
        %v328 = vld [vmem:[#allocation8 + $0x30] sm:$0xff]
        %v329 = vld [vmem:[#allocation8 + $0x38] sm:$0xff]
        %v330 = vld [vmem:[#allocation8 + $0x40] sm:$0xff]
        %v331 = vld [vmem:[#allocation8 + $0x48] sm:$0xff]
        %v332 = vld [vmem:[#allocation8 + $0x50] sm:$0xff]
        %v333 = vld [vmem:[#allocation8 + $0x58] sm:$0xff]
        %v334 = vld [vmem:[#allocation8 + $0x60] sm:$0xff]
        %v335 = vld [vmem:[#allocation8 + $0x68] sm:$0xff]
        %v336 = vld [vmem:[#allocation8 + $0x70] sm:$0xff]
        %v337 = vld [vmem:[#allocation8 + $0x78] sm:$0xff]
        %v338 = vld [vmem:[#allocation8 + $0x80] sm:$0xff]
        %v339 = vld [vmem:[#allocation8 + $0x88] sm:$0xff]
        %v340 = vld [vmem:[#allocation8 + $0x90] sm:$0xff]
        %v341 = vld [vmem:[#allocation8 + $0x98] sm:$0xff]
        %v342 = vld [vmem:[#allocation8 + $0xa0] sm:$0xff]
        %v343 = vld [vmem:[#allocation8 + $0xa8] sm:$0xff]
        %v344 = vld [vmem:[#allocation8 + $0xb0] sm:$0xff]
        %v345 = vld [vmem:[#allocation8 + $0xb8] sm:$0xff]
        %v346 = vld [vmem:[#allocation8 + $0xc0] sm:$0xff]
        %v347 = vld [vmem:[#allocation8 + $0xc8] sm:$0xff]
        %v348 = vld [vmem:[#allocation8 + $0xd0] sm:$0xff]
        %v349 = vld [vmem:[#allocation8 + $0xd8] sm:$0xff]
        %v350 = vld [vmem:[#allocation8 + $0xe0] sm:$0xff]
        %v351 = vld [vmem:[#allocation8 + $0xe8] sm:$0xff]
        %v352 = vld [vmem:[#allocation8 + $0xf0] sm:$0xff]
        %v353 = vld [vmem:[#allocation8 + $0xf8] sm:$0xff]
        %v354 = vld [vmem:[#allocation8 + $0x100] sm:$0xff]
        %v355 = vld [vmem:[#allocation8 + $0x108] sm:$0xff]
        %v356 = vld [vmem:[#allocation8 + $0x110] sm:$0xff]
        %v357 = vld [vmem:[#allocation8 + $0x118] sm:$0xff]
        %v358 = vld [vmem:[#allocation8 + $0x120] sm:$0xff]
        %v359 = vld [vmem:[#allocation8 + $0x128] sm:$0xff]
        %v360 = vld [vmem:[#allocation8 + $0x130] sm:$0xff]
        %v361 = vld [vmem:[#allocation8 + $0x138] sm:$0xff]
        %v362 = vpack.c.bf16 %v318, %v318
        %v363 = vpack.c.bf16 %v319, %v319
        %s364 = scalar_lea.vmem [#allocation8], 320
        %v365 = vld [vmem:[%s364] sm:$0xff]
        %v366 = vld [vmem:[%s364 + $0x8] sm:$0xff]
        %v367 = vld [vmem:[%s364 + $0x10] sm:$0xff]
        %v368 = vld [vmem:[%s364 + $0x18] sm:$0xff]
        %v369 = vld [vmem:[%s364 + $0x20] sm:$0xff]
        %v370 = vld [vmem:[%s364 + $0x28] sm:$0xff]
        %v371 = vld [vmem:[%s364 + $0x30] sm:$0xff]
        %v372 = vld [vmem:[%s364 + $0x38] sm:$0xff]
        %v373 = vld [vmem:[%s364 + $0x40] sm:$0xff]
        %v374 = vld [vmem:[%s364 + $0x48] sm:$0xff]
        %v375 = vld [vmem:[%s364 + $0x50] sm:$0xff]
        %v376 = vld [vmem:[%s364 + $0x58] sm:$0xff]
        %v377 = vld [vmem:[%s364 + $0x60] sm:$0xff]
        %v378 = vld [vmem:[%s364 + $0x68] sm:$0xff]
        %v379 = vld [vmem:[%s364 + $0x70] sm:$0xff]
        %v380 = vld [vmem:[%s364 + $0x78] sm:$0xff]
        %v381 = vld [vmem:[%s364 + $0x80] sm:$0xff]
        %v382 = vld [vmem:[%s364 + $0x88] sm:$0xff]
        %v383 = vld [vmem:[%s364 + $0x90] sm:$0xff]
        %v384 = vld [vmem:[%s364 + $0x98] sm:$0xff]
        %v385 = vld [vmem:[%s364 + $0xa0] sm:$0xff]
        %v386 = vld [vmem:[%s364 + $0xa8] sm:$0xff]
        %v387 = vld [vmem:[%s364 + $0xb0] sm:$0xff]
        %v388 = vld [vmem:[%s364 + $0xb8] sm:$0xff]
        %v389 = vld [vmem:[%s364 + $0xc0] sm:$0xff]
        %v390 = vld [vmem:[%s364 + $0xc8] sm:$0xff]
        %v391 = vld [vmem:[%s364 + $0xd0] sm:$0xff]
        %v392 = vld [vmem:[%s364 + $0xd8] sm:$0xff]
        %v393 = vld [vmem:[%s364 + $0xe0] sm:$0xff]
        %v394 = vld [vmem:[%s364 + $0xe8] sm:$0xff]
        %v395 = vld [vmem:[%s364 + $0xf0] sm:$0xff]
        %v396 = vld [vmem:[%s364 + $0xf8] sm:$0xff]
        %v397 = vld [vmem:[%s364 + $0x100] sm:$0xff]
        %v398 = vld [vmem:[%s364 + $0x108] sm:$0xff]
        %v399 = vld [vmem:[%s364 + $0x110] sm:$0xff]
        %v400 = vld [vmem:[%s364 + $0x118] sm:$0xff]
        %v401 = vld [vmem:[%s364 + $0x120] sm:$0xff]
        %v402 = vld [vmem:[%s364 + $0x128] sm:$0xff]
        %v403 = vld [vmem:[%s364 + $0x130] sm:$0xff]
        %v404 = vld [vmem:[%s364 + $0x138] sm:$0xff]
        %vm405 = vsmask.f32 7424
        %v407 = vshrl.u32 %v320, 16
        %v409 = vshll.u32 %v320, 16
        %v411 = vrot.slane %v409, 1
        %v412 = vor.u32 %v407, %v411
        %v414 = vshll.u32 %v362, 16
        %v416 = vrot.slane %v414, 1
        %v417 = vsel %vm405, %v412, %v416
        %v419 = vshrl.u32 %v321, 16
        %v421 = vshll.u32 %v321, 16
        %v423 = vrot.slane %v421, 1
        %v424 = vor.u32 %v419, %v423
        %v426 = vshll.u32 %v363, 16
        %v428 = vrot.slane %v426, 1
        %v429 = vsel %vm405, %v424, %v428
        %v471 = vunpack.c.l.b16 %v365
        %v472 = vunpack.c.h.b16 %v365
        %v473 = vunpack.c.l.b16 %v366
        %v474 = vunpack.c.h.b16 %v366
        %v475 = vunpack.c.l.b16 %v367
        %v476 = vunpack.c.h.b16 %v367
        %v477 = vunpack.c.l.b16 %v368
        %v478 = vunpack.c.h.b16 %v368
        %v479 = vunpack.c.l.b16 %v369
        %v480 = vunpack.c.h.b16 %v369
        %v481 = vunpack.c.l.b16 %v370
        %v482 = vunpack.c.h.b16 %v370
        %v483 = vunpack.c.l.b16 %v371
        %v484 = vunpack.c.h.b16 %v371
        %v485 = vunpack.c.l.b16 %v372
        %v486 = vunpack.c.h.b16 %v372
        %v487 = vunpack.c.l.b16 %v373
        %v488 = vunpack.c.h.b16 %v373
        %v489 = vunpack.c.l.b16 %v374
        %v490 = vunpack.c.h.b16 %v374
        %v491 = vunpack.c.l.b16 %v375
        %v492 = vunpack.c.h.b16 %v375
        %v493 = vunpack.c.l.b16 %v376
        %v494 = vunpack.c.h.b16 %v376
        %v495 = vunpack.c.l.b16 %v377
        %v496 = vunpack.c.h.b16 %v377
        %v497 = vunpack.c.l.b16 %v378
        %v498 = vunpack.c.h.b16 %v378
        %v499 = vunpack.c.l.b16 %v379
        %v500 = vunpack.c.h.b16 %v379
        %v501 = vunpack.c.l.b16 %v380
        %v502 = vunpack.c.h.b16 %v380
        %v503 = vunpack.c.l.b16 %v381
        %v504 = vunpack.c.h.b16 %v381
        %v505 = vunpack.c.l.b16 %v382
        %v506 = vunpack.c.h.b16 %v382
        %v507 = vunpack.c.l.b16 %v383
        %v508 = vunpack.c.h.b16 %v383
        %v509 = vunpack.c.l.b16 %v384
        %v510 = vunpack.c.h.b16 %v384
        %v511 = vunpack.c.l.b16 %v385
        %v512 = vunpack.c.h.b16 %v385
        %v513 = vunpack.c.l.b16 %v386
        %v514 = vunpack.c.h.b16 %v386
        %v515 = vunpack.c.l.b16 %v387
        %v516 = vunpack.c.h.b16 %v387
        %v517 = vunpack.c.l.b16 %v388
        %v518 = vunpack.c.h.b16 %v388
        %v519 = vunpack.c.l.b16 %v389
        %v520 = vunpack.c.h.b16 %v389
        %v521 = vunpack.c.l.b16 %v390
        %v522 = vunpack.c.h.b16 %v390
        %v523 = vunpack.c.l.b16 %v391
        %v524 = vunpack.c.h.b16 %v391
        %v525 = vunpack.c.l.b16 %v392
        %v526 = vunpack.c.h.b16 %v392
        %v527 = vunpack.c.l.b16 %v393
        %v528 = vunpack.c.h.b16 %v393
        %v529 = vunpack.c.l.b16 %v394
        %v530 = vunpack.c.h.b16 %v394
        %v531 = vunpack.c.l.b16 %v395
        %v532 = vunpack.c.h.b16 %v395
        %v533 = vunpack.c.l.b16 %v396
        %v534 = vunpack.c.h.b16 %v396
        %v535 = vunpack.c.l.b16 %v397
        %v536 = vunpack.c.h.b16 %v397
        %v537 = vunpack.c.l.b16 %v398
        %v538 = vunpack.c.h.b16 %v398
        %v539 = vunpack.c.l.b16 %v399
        %v540 = vunpack.c.h.b16 %v399
        %v541 = vunpack.c.l.b16 %v400
        %v542 = vunpack.c.h.b16 %v400
        %v543 = vunpack.c.l.b16 %v401
        %v544 = vunpack.c.h.b16 %v401
        %v545 = vunpack.c.l.b16 %v402
        %v546 = vunpack.c.h.b16 %v402
        %v547 = vunpack.c.l.b16 %v403
        %v548 = vunpack.c.h.b16 %v403
        %v549 = vunpack.c.l.b16 %v404
        %v550 = vunpack.c.h.b16 %v404
        %v551 = vpack.c.b16 %v475, %v471
        %v552 = vpack.c.b16 %v476, %v472
        %v553 = vpack.c.b16 %v477, %v473
        %v554 = vpack.c.b16 %v478, %v474
        %v555 = vpack.c.b16 %v483, %v479
        %v556 = vpack.c.b16 %v484, %v480
        %v557 = vpack.c.b16 %v485, %v481
        %v558 = vpack.c.b16 %v486, %v482
        %v559 = vpack.c.b16 %v491, %v487
        %v560 = vpack.c.b16 %v492, %v488
        %v561 = vpack.c.b16 %v493, %v489
        %v562 = vpack.c.b16 %v494, %v490
        %v563 = vpack.c.b16 %v499, %v495
        %v564 = vpack.c.b16 %v500, %v496
        %v565 = vpack.c.b16 %v501, %v497
        %v566 = vpack.c.b16 %v502, %v498
        %v567 = vpack.c.b16 %v507, %v503
        %v568 = vpack.c.b16 %v508, %v504
        %v569 = vpack.c.b16 %v509, %v505
        %v570 = vpack.c.b16 %v510, %v506
        %v571 = vpack.c.b16 %v515, %v511
        %v572 = vpack.c.b16 %v516, %v512
        %v573 = vpack.c.b16 %v517, %v513
        %v574 = vpack.c.b16 %v518, %v514
        %v575 = vpack.c.b16 %v523, %v519
        %v576 = vpack.c.b16 %v524, %v520
        %v577 = vpack.c.b16 %v525, %v521
        %v578 = vpack.c.b16 %v526, %v522
        %v579 = vpack.c.b16 %v531, %v527
        %v580 = vpack.c.b16 %v532, %v528
        %v581 = vpack.c.b16 %v533, %v529
        %v582 = vpack.c.b16 %v534, %v530
        %v583 = vpack.c.b16 %v539, %v535
        %v584 = vpack.c.b16 %v540, %v536
        %v585 = vpack.c.b16 %v541, %v537
        %v586 = vpack.c.b16 %v542, %v538
        %v587 = vpack.c.b16 %v547, %v543
        %v588 = vpack.c.b16 %v548, %v544
        %v589 = vpack.c.b16 %v549, %v545
        %v590 = vpack.c.b16 %v550, %v546
        %vm631 = vcmask 261120
        %v633 = vsel %vm631, %v429, 0
        %635 = vmatprep.subr.bf16.mxu0 %v552
        %636 = vmatpush1.bf16.msra.mxu0 %v551
        %637 = vmatprep.subr.bf16.mxu0 %v556
        %638 = vmatpush1.bf16.msra.mxu0 %v555
        %639 = vmatprep.subr.bf16.mxu0 %v560
        %640 = vmatpush1.bf16.msra.mxu0 %v559
        %641 = vmatprep.subr.bf16.mxu0 %v564
        %642 = vmatpush1.bf16.msra.mxu0 %v563
        %643 = vmatprep.subr.bf16.mxu0 %v568
        %644 = vmatpush1.bf16.msra.mxu0 %v567
        %645 = vmatprep.subr.bf16.mxu0 %v572
        %646 = vmatpush1.bf16.msra.mxu0 %v571
        %647 = vmatprep.subr.bf16.mxu0 %v576
        %648 = vmatpush1.bf16.msra.mxu0 %v575
        %649 = vmatprep.subr.bf16.mxu0 %v580
        %650 = vmatpush1.bf16.msra.mxu0 %v579
        %651 = vmatprep.subr.bf16.mxu0 %v584
        %652 = vmatpush1.bf16.msra.mxu0 %v583
        %653 = vmatprep.subr.bf16.mxu0 %v588
        %654 = vmatpush1.bf16.msra.mxu0 %v587
        %655 = vmatprep.subr.bf16.mxu0 0
        %656 = vmatpush1.bf16.msra.mxu0 0
        %657 = vmatprep.subr.bf16.mxu0 0
        %658 = vmatpush1.bf16.msra.mxu0 0
        %659 = vmatprep.subr.bf16.mxu0 0
        %660 = vmatpush1.bf16.msra.mxu0 0
        %661 = vmatprep.subr.bf16.mxu0 0
        %662 = vmatpush1.bf16.msra.mxu0 0
        %663 = vmatprep.subr.bf16.mxu0 0
        %664 = vmatpush1.bf16.msra.mxu0 0
        %665 = vmatprep.subr.bf16.mxu0 0
        %666 = vmatpush1.bf16.msra.mxu0 0
        %667 = vmatprep.mubr.bf16.mxu0 %v633
        %668 = vmatmul.mubr.bf16.gmra.mrb[0].mxu0 %v417
        %v669 = vpop.f32.mrb[0].mxu0
        %v670 = vadd.f32 0.0, %v669
        %v671 = vpop.f32.mrb[0].mxu0
        %v672 = vadd.f32 0.0, %v671
        %v673 = vpop.f32.mrb[0].mxu0
        %v674 = vadd.f32 0.0, %v673
        %v675 = vpop.f32.mrb[0].mxu0
        %v676 = vadd.f32 0.0, %v675
        %677 = vdwg.mxu0
        %678 = vmatprep.subr.bf16.mxu0 %v554
        %679 = vmatpush1.bf16.msra.mxu0 %v553
        %680 = vmatprep.subr.bf16.mxu0 %v558
        %681 = vmatpush1.bf16.msra.mxu0 %v557
        %682 = vmatprep.subr.bf16.mxu0 %v562
        %683 = vmatpush1.bf16.msra.mxu0 %v561
        %684 = vmatprep.subr.bf16.mxu0 %v566
        %685 = vmatpush1.bf16.msra.mxu0 %v565
        %686 = vmatprep.subr.bf16.mxu0 %v570
        %687 = vmatpush1.bf16.msra.mxu0 %v569
        %688 = vmatprep.subr.bf16.mxu0 %v574
        %689 = vmatpush1.bf16.msra.mxu0 %v573
        %690 = vmatprep.subr.bf16.mxu0 %v578
        %691 = vmatpush1.bf16.msra.mxu0 %v577
        %692 = vmatprep.subr.bf16.mxu0 %v582
        %693 = vmatpush1.bf16.msra.mxu0 %v581
        %694 = vmatprep.subr.bf16.mxu0 %v586
        %695 = vmatpush1.bf16.msra.mxu0 %v585
        %696 = vmatprep.subr.bf16.mxu0 %v590
        %697 = vmatpush1.bf16.msra.mxu0 %v589
        %698 = vmatprep.subr.bf16.mxu0 0
        %699 = vmatpush1.bf16.msra.mxu0 0
        %700 = vmatprep.subr.bf16.mxu0 0
        %701 = vmatpush1.bf16.msra.mxu0 0
        %702 = vmatprep.subr.bf16.mxu0 0
        %703 = vmatpush1.bf16.msra.mxu0 0
        %704 = vmatprep.subr.bf16.mxu0 0
        %705 = vmatpush1.bf16.msra.mxu0 0
        %706 = vmatprep.subr.bf16.mxu0 0
        %707 = vmatpush1.bf16.msra.mxu0 0
        %708 = vmatprep.subr.bf16.mxu0 0
        %709 = vmatpush1.bf16.msra.mxu0 0
        %710 = vmatprep.mubr.bf16.mxu0 %v633
        %711 = vmatmul.mubr.bf16.gmra.mrb[0].mxu0 %v417
        %v712 = vpop.f32.mrb[0].mxu0
        %v713 = vadd.f32 0.0, %v712
        %v714 = vpop.f32.mrb[0].mxu0
        %v715 = vadd.f32 0.0, %v714
        %v716 = vpop.f32.mrb[0].mxu0
        %v717 = vadd.f32 0.0, %v716
        %v718 = vpop.f32.mrb[0].mxu0
        %v719 = vadd.f32 0.0, %v718
        %720 = vdwg.mxu0
        %v761 = vunpack.c.l.b16 %v322
        %v762 = vunpack.c.h.b16 %v322
        %v763 = vunpack.c.l.b16 %v323
        %v764 = vunpack.c.h.b16 %v323
        %v765 = vunpack.c.l.b16 %v324
        %v766 = vunpack.c.h.b16 %v324
        %v767 = vunpack.c.l.b16 %v325
        %v768 = vunpack.c.h.b16 %v325
        %v769 = vunpack.c.l.b16 %v326
        %v770 = vunpack.c.h.b16 %v326
        %v771 = vunpack.c.l.b16 %v327
        %v772 = vunpack.c.h.b16 %v327
        %v773 = vunpack.c.l.b16 %v328
        %v774 = vunpack.c.h.b16 %v328
        %v775 = vunpack.c.l.b16 %v329
        %v776 = vunpack.c.h.b16 %v329
        %v777 = vunpack.c.l.b16 %v330
        %v778 = vunpack.c.h.b16 %v330
        %v779 = vunpack.c.l.b16 %v331
        %v780 = vunpack.c.h.b16 %v331
        %v781 = vunpack.c.l.b16 %v332
        %v782 = vunpack.c.h.b16 %v332
        %v783 = vunpack.c.l.b16 %v333
        %v784 = vunpack.c.h.b16 %v333
        %v785 = vunpack.c.l.b16 %v334
        %v786 = vunpack.c.h.b16 %v334
        %v787 = vunpack.c.l.b16 %v335
        %v788 = vunpack.c.h.b16 %v335
        %v789 = vunpack.c.l.b16 %v336
        %v790 = vunpack.c.h.b16 %v336
        %v791 = vunpack.c.l.b16 %v337
        %v792 = vunpack.c.h.b16 %v337
        %v793 = vunpack.c.l.b16 %v338
        %v794 = vunpack.c.h.b16 %v338
        %v795 = vunpack.c.l.b16 %v339
        %v796 = vunpack.c.h.b16 %v339
        %v797 = vunpack.c.l.b16 %v340
        %v798 = vunpack.c.h.b16 %v340
        %v799 = vunpack.c.l.b16 %v341
        %v800 = vunpack.c.h.b16 %v341
        %v801 = vunpack.c.l.b16 %v342
        %v802 = vunpack.c.h.b16 %v342
        %v803 = vunpack.c.l.b16 %v343
        %v804 = vunpack.c.h.b16 %v343
        %v805 = vunpack.c.l.b16 %v344
        %v806 = vunpack.c.h.b16 %v344
        %v807 = vunpack.c.l.b16 %v345
        %v808 = vunpack.c.h.b16 %v345
        %v809 = vunpack.c.l.b16 %v346
        %v810 = vunpack.c.h.b16 %v346
        %v811 = vunpack.c.l.b16 %v347
        %v812 = vunpack.c.h.b16 %v347
        %v813 = vunpack.c.l.b16 %v348
        %v814 = vunpack.c.h.b16 %v348
        %v815 = vunpack.c.l.b16 %v349
        %v816 = vunpack.c.h.b16 %v349
        %v817 = vunpack.c.l.b16 %v350
        %v818 = vunpack.c.h.b16 %v350
        %v819 = vunpack.c.l.b16 %v351
        %v820 = vunpack.c.h.b16 %v351
        %v821 = vunpack.c.l.b16 %v352
        %v822 = vunpack.c.h.b16 %v352
        %v823 = vunpack.c.l.b16 %v353
        %v824 = vunpack.c.h.b16 %v353
        %v825 = vunpack.c.l.b16 %v354
        %v826 = vunpack.c.h.b16 %v354
        %v827 = vunpack.c.l.b16 %v355
        %v828 = vunpack.c.h.b16 %v355
        %v829 = vunpack.c.l.b16 %v356
        %v830 = vunpack.c.h.b16 %v356
        %v831 = vunpack.c.l.b16 %v357
        %v832 = vunpack.c.h.b16 %v357
        %v833 = vunpack.c.l.b16 %v358
        %v834 = vunpack.c.h.b16 %v358
        %v835 = vunpack.c.l.b16 %v359
        %v836 = vunpack.c.h.b16 %v359
        %v837 = vunpack.c.l.b16 %v360
        %v838 = vunpack.c.h.b16 %v360
        %v839 = vunpack.c.l.b16 %v361
        %v840 = vunpack.c.h.b16 %v361
        %v841 = vpack.c.b16 %v765, %v761
        %v842 = vpack.c.b16 %v766, %v762
        %v843 = vpack.c.b16 %v767, %v763
        %v844 = vpack.c.b16 %v768, %v764
        %v845 = vpack.c.b16 %v773, %v769
        %v846 = vpack.c.b16 %v774, %v770
        %v847 = vpack.c.b16 %v775, %v771
        %v848 = vpack.c.b16 %v776, %v772
        %v849 = vpack.c.b16 %v781, %v777
        %v850 = vpack.c.b16 %v782, %v778
        %v851 = vpack.c.b16 %v783, %v779
        %v852 = vpack.c.b16 %v784, %v780
        %v853 = vpack.c.b16 %v789, %v785
        %v854 = vpack.c.b16 %v790, %v786
        %v855 = vpack.c.b16 %v791, %v787
        %v856 = vpack.c.b16 %v792, %v788
        %v857 = vpack.c.b16 %v797, %v793
        %v858 = vpack.c.b16 %v798, %v794
        %v859 = vpack.c.b16 %v799, %v795
        %v860 = vpack.c.b16 %v800, %v796
        %v861 = vpack.c.b16 %v805, %v801
        %v862 = vpack.c.b16 %v806, %v802
        %v863 = vpack.c.b16 %v807, %v803
        %v864 = vpack.c.b16 %v808, %v804
        %v865 = vpack.c.b16 %v813, %v809
        %v866 = vpack.c.b16 %v814, %v810
        %v867 = vpack.c.b16 %v815, %v811
        %v868 = vpack.c.b16 %v816, %v812
        %v869 = vpack.c.b16 %v821, %v817
        %v870 = vpack.c.b16 %v822, %v818
        %v871 = vpack.c.b16 %v823, %v819
        %v872 = vpack.c.b16 %v824, %v820
        %v873 = vpack.c.b16 %v829, %v825
        %v874 = vpack.c.b16 %v830, %v826
        %v875 = vpack.c.b16 %v831, %v827
        %v876 = vpack.c.b16 %v832, %v828
        %v877 = vpack.c.b16 %v837, %v833
        %v878 = vpack.c.b16 %v838, %v834
        %v879 = vpack.c.b16 %v839, %v835
        %v880 = vpack.c.b16 %v840, %v836
        %v921 = vsel %vm631, %v321, 0
        %923 = vmatprep.subr.bf16.mxu0 %v842
        %924 = vmatpush1.bf16.msra.mxu0 %v841
        %925 = vmatprep.subr.bf16.mxu0 %v846
        %926 = vmatpush1.bf16.msra.mxu0 %v845
        %927 = vmatprep.subr.bf16.mxu0 %v850
        %928 = vmatpush1.bf16.msra.mxu0 %v849
        %929 = vmatprep.subr.bf16.mxu0 %v854
        %930 = vmatpush1.bf16.msra.mxu0 %v853
        %931 = vmatprep.subr.bf16.mxu0 %v858
        %932 = vmatpush1.bf16.msra.mxu0 %v857
        %933 = vmatprep.subr.bf16.mxu0 %v862
        %934 = vmatpush1.bf16.msra.mxu0 %v861
        %935 = vmatprep.subr.bf16.mxu0 %v866
        %936 = vmatpush1.bf16.msra.mxu0 %v865
        %937 = vmatprep.subr.bf16.mxu0 %v870
        %938 = vmatpush1.bf16.msra.mxu0 %v869
        %939 = vmatprep.subr.bf16.mxu0 %v874
        %940 = vmatpush1.bf16.msra.mxu0 %v873
        %941 = vmatprep.subr.bf16.mxu0 %v878
        %942 = vmatpush1.bf16.msra.mxu0 %v877
        %943 = vmatprep.subr.bf16.mxu0 0
        %944 = vmatpush1.bf16.msra.mxu0 0
        %945 = vmatprep.subr.bf16.mxu0 0
        %946 = vmatpush1.bf16.msra.mxu0 0
        %947 = vmatprep.subr.bf16.mxu0 0
        %948 = vmatpush1.bf16.msra.mxu0 0
        %949 = vmatprep.subr.bf16.mxu0 0
        %950 = vmatpush1.bf16.msra.mxu0 0
        %951 = vmatprep.subr.bf16.mxu0 0
        %952 = vmatpush1.bf16.msra.mxu0 0
        %953 = vmatprep.subr.bf16.mxu0 0
        %954 = vmatpush1.bf16.msra.mxu0 0
        %955 = vmatprep.mubr.bf16.mxu0 %v921
        %956 = vmatmul.mubr.bf16.gmra.mrb[0].mxu0 %v320
        %v957 = vpop.f32.mrb[0].mxu0
        %v958 = vadd.f32 %v670, %v957
        %v959 = vpop.f32.mrb[0].mxu0
        %v960 = vadd.f32 %v672, %v959
        %v961 = vpop.f32.mrb[0].mxu0
        %v962 = vadd.f32 %v674, %v961
        %v963 = vpop.f32.mrb[0].mxu0
        %v964 = vadd.f32 %v676, %v963
        %965 = vdwg.mxu0
        %966 = vmatprep.subr.bf16.mxu0 %v844
        %967 = vmatpush1.bf16.msra.mxu0 %v843
        %968 = vmatprep.subr.bf16.mxu0 %v848
        %969 = vmatpush1.bf16.msra.mxu0 %v847
        %970 = vmatprep.subr.bf16.mxu0 %v852
        %971 = vmatpush1.bf16.msra.mxu0 %v851
        %972 = vmatprep.subr.bf16.mxu0 %v856
        %973 = vmatpush1.bf16.msra.mxu0 %v855
        %974 = vmatprep.subr.bf16.mxu0 %v860
        %975 = vmatpush1.bf16.msra.mxu0 %v859
        %976 = vmatprep.subr.bf16.mxu0 %v864
        %977 = vmatpush1.bf16.msra.mxu0 %v863
        %978 = vmatprep.subr.bf16.mxu0 %v868
        %979 = vmatpush1.bf16.msra.mxu0 %v867
        %980 = vmatprep.subr.bf16.mxu0 %v872
        %981 = vmatpush1.bf16.msra.mxu0 %v871
        %982 = vmatprep.subr.bf16.mxu0 %v876
        %983 = vmatpush1.bf16.msra.mxu0 %v875
        %984 = vmatprep.subr.bf16.mxu0 %v880
        %985 = vmatpush1.bf16.msra.mxu0 %v879
        %986 = vmatprep.subr.bf16.mxu0 0
        %987 = vmatpush1.bf16.msra.mxu0 0
        %988 = vmatprep.subr.bf16.mxu0 0
        %989 = vmatpush1.bf16.msra.mxu0 0
        %990 = vmatprep.subr.bf16.mxu0 0
        %991 = vmatpush1.bf16.msra.mxu0 0
        %992 = vmatprep.subr.bf16.mxu0 0
        %993 = vmatpush1.bf16.msra.mxu0 0
        %994 = vmatprep.subr.bf16.mxu0 0
        %995 = vmatpush1.bf16.msra.mxu0 0
        %996 = vmatprep.subr.bf16.mxu0 0
        %997 = vmatpush1.bf16.msra.mxu0 0
        %998 = vmatprep.mubr.bf16.mxu0 %v921
        %999 = vmatmul.mubr.bf16.gmra.mrb[0].mxu0 %v320
        %v1000 = vpop.f32.mrb[0].mxu0
        %v1001 = vadd.f32 %v713, %v1000
        %v1002 = vpop.f32.mrb[0].mxu0
        %v1003 = vadd.f32 %v715, %v1002
        %v1004 = vpop.f32.mrb[0].mxu0
        %v1005 = vadd.f32 %v717, %v1004
        %v1006 = vpop.f32.mrb[0].mxu0
        %v1007 = vadd.f32 %v719, %v1006
        %1008 = vdwg.mxu0
        %s1009 = scalar_lea.vmem [#allocation8], 640
        %v1010 = vld [vmem:[%s1009] sm:$0xff]
        %v1011 = vld [vmem:[%s1009 + $0x8] sm:$0xff]
        %v1012 = vld [vmem:[%s1009 + $0x10] sm:$0xff]
        %v1013 = vld [vmem:[%s1009 + $0x18] sm:$0xff]
        %v1014 = vld [vmem:[%s1009 + $0x20] sm:$0xff]
        %v1015 = vld [vmem:[%s1009 + $0x28] sm:$0xff]
        %v1016 = vld [vmem:[%s1009 + $0x30] sm:$0xff]
        %v1017 = vld [vmem:[%s1009 + $0x38] sm:$0xff]
        %v1018 = vld [vmem:[%s1009 + $0x40] sm:$0xff]
        %v1019 = vld [vmem:[%s1009 + $0x48] sm:$0xff]
        %v1020 = vld [vmem:[%s1009 + $0x50] sm:$0xff]
        %v1021 = vld [vmem:[%s1009 + $0x58] sm:$0xff]
        %v1022 = vld [vmem:[%s1009 + $0x60] sm:$0xff]
        %v1023 = vld [vmem:[%s1009 + $0x68] sm:$0xff]
        %v1024 = vld [vmem:[%s1009 + $0x70] sm:$0xff]
        %v1025 = vld [vmem:[%s1009 + $0x78] sm:$0xff]
        %v1026 = vld [vmem:[%s1009 + $0x80] sm:$0xff]
        %v1027 = vld [vmem:[%s1009 + $0x88] sm:$0xff]
        %v1028 = vld [vmem:[%s1009 + $0x90] sm:$0xff]
        %v1029 = vld [vmem:[%s1009 + $0x98] sm:$0xff]
        %v1030 = vld [vmem:[%s1009 + $0xa0] sm:$0xff]
        %v1031 = vld [vmem:[%s1009 + $0xa8] sm:$0xff]
        %v1032 = vld [vmem:[%s1009 + $0xb0] sm:$0xff]
        %v1033 = vld [vmem:[%s1009 + $0xb8] sm:$0xff]
        %v1034 = vld [vmem:[%s1009 + $0xc0] sm:$0xff]
        %v1035 = vld [vmem:[%s1009 + $0xc8] sm:$0xff]
        %v1036 = vld [vmem:[%s1009 + $0xd0] sm:$0xff]
        %v1037 = vld [vmem:[%s1009 + $0xd8] sm:$0xff]
        %v1038 = vld [vmem:[%s1009 + $0xe0] sm:$0xff]
        %v1039 = vld [vmem:[%s1009 + $0xe8] sm:$0xff]
        %v1040 = vld [vmem:[%s1009 + $0xf0] sm:$0xff]
        %v1041 = vld [vmem:[%s1009 + $0xf8] sm:$0xff]
        %v1042 = vld [vmem:[%s1009 + $0x100] sm:$0xff]
        %v1043 = vld [vmem:[%s1009 + $0x108] sm:$0xff]
        %v1044 = vld [vmem:[%s1009 + $0x110] sm:$0xff]
        %v1045 = vld [vmem:[%s1009 + $0x118] sm:$0xff]
        %v1046 = vld [vmem:[%s1009 + $0x120] sm:$0xff]
        %v1047 = vld [vmem:[%s1009 + $0x128] sm:$0xff]
        %v1048 = vld [vmem:[%s1009 + $0x130] sm:$0xff]
        %v1049 = vld [vmem:[%s1009 + $0x138] sm:$0xff]
        %vm1054 = vcmask 1046528
        %v1055 = vrot.slane %v320, 1
        %v1056 = vrot.slane %v362, 1
        %v1057 = vsel %vm1054, %v1055, %v1056
        %v1058 = vrot.slane %v321, 1
        %v1059 = vrot.slane %v363, 1
        %v1060 = vsel %vm1054, %v1058, %v1059
        %v1102 = vunpack.c.l.b16 %v1010
        %v1103 = vunpack.c.h.b16 %v1010
        %v1104 = vunpack.c.l.b16 %v1011
        %v1105 = vunpack.c.h.b16 %v1011
        %v1106 = vunpack.c.l.b16 %v1012
        %v1107 = vunpack.c.h.b16 %v1012
        %v1108 = vunpack.c.l.b16 %v1013
        %v1109 = vunpack.c.h.b16 %v1013
        %v1110 = vunpack.c.l.b16 %v1014
        %v1111 = vunpack.c.h.b16 %v1014
        %v1112 = vunpack.c.l.b16 %v1015
        %v1113 = vunpack.c.h.b16 %v1015
        %v1114 = vunpack.c.l.b16 %v1016
        %v1115 = vunpack.c.h.b16 %v1016
        %v1116 = vunpack.c.l.b16 %v1017
        %v1117 = vunpack.c.h.b16 %v1017
        %v1118 = vunpack.c.l.b16 %v1018
        %v1119 = vunpack.c.h.b16 %v1018
        %v1120 = vunpack.c.l.b16 %v1019
        %v1121 = vunpack.c.h.b16 %v1019
        %v1122 = vunpack.c.l.b16 %v1020
        %v1123 = vunpack.c.h.b16 %v1020
        %v1124 = vunpack.c.l.b16 %v1021
        %v1125 = vunpack.c.h.b16 %v1021
        %v1126 = vunpack.c.l.b16 %v1022
        %v1127 = vunpack.c.h.b16 %v1022
        %v1128 = vunpack.c.l.b16 %v1023
        %v1129 = vunpack.c.h.b16 %v1023
        %v1130 = vunpack.c.l.b16 %v1024
        %v1131 = vunpack.c.h.b16 %v1024
        %v1132 = vunpack.c.l.b16 %v1025
        %v1133 = vunpack.c.h.b16 %v1025
        %v1134 = vunpack.c.l.b16 %v1026
        %v1135 = vunpack.c.h.b16 %v1026
        %v1136 = vunpack.c.l.b16 %v1027
        %v1137 = vunpack.c.h.b16 %v1027
        %v1138 = vunpack.c.l.b16 %v1028
        %v1139 = vunpack.c.h.b16 %v1028
        %v1140 = vunpack.c.l.b16 %v1029
        %v1141 = vunpack.c.h.b16 %v1029
        %v1142 = vunpack.c.l.b16 %v1030
        %v1143 = vunpack.c.h.b16 %v1030
        %v1144 = vunpack.c.l.b16 %v1031
        %v1145 = vunpack.c.h.b16 %v1031
        %v1146 = vunpack.c.l.b16 %v1032
        %v1147 = vunpack.c.h.b16 %v1032
        %v1148 = vunpack.c.l.b16 %v1033
        %v1149 = vunpack.c.h.b16 %v1033
        %v1150 = vunpack.c.l.b16 %v1034
        %v1151 = vunpack.c.h.b16 %v1034
        %v1152 = vunpack.c.l.b16 %v1035
        %v1153 = vunpack.c.h.b16 %v1035
        %v1154 = vunpack.c.l.b16 %v1036
        %v1155 = vunpack.c.h.b16 %v1036
        %v1156 = vunpack.c.l.b16 %v1037
        %v1157 = vunpack.c.h.b16 %v1037
        %v1158 = vunpack.c.l.b16 %v1038
        %v1159 = vunpack.c.h.b16 %v1038
        %v1160 = vunpack.c.l.b16 %v1039
        %v1161 = vunpack.c.h.b16 %v1039
        %v1162 = vunpack.c.l.b16 %v1040
        %v1163 = vunpack.c.h.b16 %v1040
        %v1164 = vunpack.c.l.b16 %v1041
        %v1165 = vunpack.c.h.b16 %v1041
        %v1166 = vunpack.c.l.b16 %v1042
        %v1167 = vunpack.c.h.b16 %v1042
        %v1168 = vunpack.c.l.b16 %v1043
        %v1169 = vunpack.c.h.b16 %v1043
        %v1170 = vunpack.c.l.b16 %v1044
        %v1171 = vunpack.c.h.b16 %v1044
        %v1172 = vunpack.c.l.b16 %v1045
        %v1173 = vunpack.c.h.b16 %v1045
        %v1174 = vunpack.c.l.b16 %v1046
        %v1175 = vunpack.c.h.b16 %v1046
        %v1176 = vunpack.c.l.b16 %v1047
        %v1177 = vunpack.c.h.b16 %v1047
        %v1178 = vunpack.c.l.b16 %v1048
        %v1179 = vunpack.c.h.b16 %v1048
        %v1180 = vunpack.c.l.b16 %v1049
        %v1181 = vunpack.c.h.b16 %v1049
        %v1182 = vpack.c.b16 %v1106, %v1102
        %v1183 = vpack.c.b16 %v1107, %v1103
        %v1184 = vpack.c.b16 %v1108, %v1104
        %v1185 = vpack.c.b16 %v1109, %v1105
        %v1186 = vpack.c.b16 %v1114, %v1110
        %v1187 = vpack.c.b16 %v1115, %v1111
        %v1188 = vpack.c.b16 %v1116, %v1112
        %v1189 = vpack.c.b16 %v1117, %v1113
        %v1190 = vpack.c.b16 %v1122, %v1118
        %v1191 = vpack.c.b16 %v1123, %v1119
        %v1192 = vpack.c.b16 %v1124, %v1120
        %v1193 = vpack.c.b16 %v1125, %v1121
        %v1194 = vpack.c.b16 %v1130, %v1126
        %v1195 = vpack.c.b16 %v1131, %v1127
        %v1196 = vpack.c.b16 %v1132, %v1128
        %v1197 = vpack.c.b16 %v1133, %v1129
        %v1198 = vpack.c.b16 %v1138, %v1134
        %v1199 = vpack.c.b16 %v1139, %v1135
        %v1200 = vpack.c.b16 %v1140, %v1136
        %v1201 = vpack.c.b16 %v1141, %v1137
        %v1202 = vpack.c.b16 %v1146, %v1142
        %v1203 = vpack.c.b16 %v1147, %v1143
        %v1204 = vpack.c.b16 %v1148, %v1144
        %v1205 = vpack.c.b16 %v1149, %v1145
        %v1206 = vpack.c.b16 %v1154, %v1150
        %v1207 = vpack.c.b16 %v1155, %v1151
        %v1208 = vpack.c.b16 %v1156, %v1152
        %v1209 = vpack.c.b16 %v1157, %v1153
        %v1210 = vpack.c.b16 %v1162, %v1158
        %v1211 = vpack.c.b16 %v1163, %v1159
        %v1212 = vpack.c.b16 %v1164, %v1160
        %v1213 = vpack.c.b16 %v1165, %v1161
        %v1214 = vpack.c.b16 %v1170, %v1166
        %v1215 = vpack.c.b16 %v1171, %v1167
        %v1216 = vpack.c.b16 %v1172, %v1168
        %v1217 = vpack.c.b16 %v1173, %v1169
        %v1218 = vpack.c.b16 %v1178, %v1174
        %v1219 = vpack.c.b16 %v1179, %v1175
        %v1220 = vpack.c.b16 %v1180, %v1176
        %v1221 = vpack.c.b16 %v1181, %v1177
        %v1263 = vsel %vm631, %v1060, 0
        %1265 = vmatprep.subr.bf16.mxu0 %v1183
        %1266 = vmatpush1.bf16.msra.mxu0 %v1182
        %1267 = vmatprep.subr.bf16.mxu0 %v1187
        %1268 = vmatpush1.bf16.msra.mxu0 %v1186
        %1269 = vmatprep.subr.bf16.mxu0 %v1191
        %1270 = vmatpush1.bf16.msra.mxu0 %v1190
        %1271 = vmatprep.subr.bf16.mxu0 %v1195
        %1272 = vmatpush1.bf16.msra.mxu0 %v1194
        %1273 = vmatprep.subr.bf16.mxu0 %v1199
        %1274 = vmatpush1.bf16.msra.mxu0 %v1198
        %1275 = vmatprep.subr.bf16.mxu0 %v1203
        %1276 = vmatpush1.bf16.msra.mxu0 %v1202
        %1277 = vmatprep.subr.bf16.mxu0 %v1207
        %1278 = vmatpush1.bf16.msra.mxu0 %v1206
        %1279 = vmatprep.subr.bf16.mxu0 %v1211
        %1280 = vmatpush1.bf16.msra.mxu0 %v1210
        %1281 = vmatprep.subr.bf16.mxu0 %v1215
        %1282 = vmatpush1.bf16.msra.mxu0 %v1214
        %1283 = vmatprep.subr.bf16.mxu0 %v1219
        %1284 = vmatpush1.bf16.msra.mxu0 %v1218
        %1285 = vmatprep.subr.bf16.mxu0 0
        %1286 = vmatpush1.bf16.msra.mxu0 0
        %1287 = vmatprep.subr.bf16.mxu0 0
        %1288 = vmatpush1.bf16.msra.mxu0 0
        %1289 = vmatprep.subr.bf16.mxu0 0
        %1290 = vmatpush1.bf16.msra.mxu0 0
        %1291 = vmatprep.subr.bf16.mxu0 0
        %1292 = vmatpush1.bf16.msra.mxu0 0
        %1293 = vmatprep.subr.bf16.mxu0 0
        %1294 = vmatpush1.bf16.msra.mxu0 0
        %1295 = vmatprep.subr.bf16.mxu0 0
        %1296 = vmatpush1.bf16.msra.mxu0 0
        %1297 = vmatprep.mubr.bf16.mxu0 %v1263
        %1298 = vmatmul.mubr.bf16.gmra.mrb[0].mxu0 %v1057
        %v1299 = vpop.f32.mrb[0].mxu0
        %v1300 = vadd.f32 0.0, %v1299
        %v1301 = vpop.f32.mrb[0].mxu0
        %v1302 = vadd.f32 0.0, %v1301
        %v1303 = vpop.f32.mrb[0].mxu0
        %v1304 = vadd.f32 0.0, %v1303
        %v1305 = vpop.f32.mrb[0].mxu0
        %v1306 = vadd.f32 0.0, %v1305
        %1307 = vdwg.mxu0
        %1308 = vmatprep.subr.bf16.mxu0 %v1185
        %1309 = vmatpush1.bf16.msra.mxu0 %v1184
        %1310 = vmatprep.subr.bf16.mxu0 %v1189
        %1311 = vmatpush1.bf16.msra.mxu0 %v1188
        %1312 = vmatprep.subr.bf16.mxu0 %v1193
        %1313 = vmatpush1.bf16.msra.mxu0 %v1192
        %1314 = vmatprep.subr.bf16.mxu0 %v1197
        %1315 = vmatpush1.bf16.msra.mxu0 %v1196
        %1316 = vmatprep.subr.bf16.mxu0 %v1201
        %1317 = vmatpush1.bf16.msra.mxu0 %v1200
        %1318 = vmatprep.subr.bf16.mxu0 %v1205
        %1319 = vmatpush1.bf16.msra.mxu0 %v1204
        %1320 = vmatprep.subr.bf16.mxu0 %v1209
        %1321 = vmatpush1.bf16.msra.mxu0 %v1208
        %1322 = vmatprep.subr.bf16.mxu0 %v1213
        %1323 = vmatpush1.bf16.msra.mxu0 %v1212
        %1324 = vmatprep.subr.bf16.mxu0 %v1217
        %1325 = vmatpush1.bf16.msra.mxu0 %v1216
        %1326 = vmatprep.subr.bf16.mxu0 %v1221
        %1327 = vmatpush1.bf16.msra.mxu0 %v1220
        %1328 = vmatprep.subr.bf16.mxu0 0
        %1329 = vmatpush1.bf16.msra.mxu0 0
        %1330 = vmatprep.subr.bf16.mxu0 0
        %1331 = vmatpush1.bf16.msra.mxu0 0
        %1332 = vmatprep.subr.bf16.mxu0 0
        %1333 = vmatpush1.bf16.msra.mxu0 0
        %1334 = vmatprep.subr.bf16.mxu0 0
        %1335 = vmatpush1.bf16.msra.mxu0 0
        %1336 = vmatprep.subr.bf16.mxu0 0
        %1337 = vmatpush1.bf16.msra.mxu0 0
        %1338 = vmatprep.subr.bf16.mxu0 0
        %1339 = vmatpush1.bf16.msra.mxu0 0
        %1340 = vmatprep.mubr.bf16.mxu0 %v1263
        %1341 = vmatmul.mubr.bf16.gmra.mrb[0].mxu0 %v1057
        %v1342 = vpop.f32.mrb[0].mxu0
        %v1343 = vadd.f32 0.0, %v1342
        %v1344 = vpop.f32.mrb[0].mxu0
        %v1345 = vadd.f32 0.0, %v1344
        %v1346 = vpop.f32.mrb[0].mxu0
        %v1347 = vadd.f32 0.0, %v1346
        %v1348 = vpop.f32.mrb[0].mxu0
        %v1349 = vadd.f32 0.0, %v1348
        %1350 = vdwg.mxu0
        %v1351 = vadd.f32 %v958, %v1300
        %v1352 = vadd.f32 %v960, %v1302
        %v1353 = vadd.f32 %v1001, %v1343
        %v1354 = vadd.f32 %v1003, %v1345
        %v1355 = vadd.f32 %v962, %v1304
        %v1356 = vadd.f32 %v964, %v1306
        %v1357 = vadd.f32 %v1005, %v1347
        %v1358 = vadd.f32 %v1007, %v1349
        %s1359 = scalar_lea.vmem [#allocation8], 960
        %v1360 = vld [vmem:[%s1359] sm:$0xff]
        %v1361 = vld [vmem:[%s1359 + $0x8] sm:$0xff]
        %v1362 = vld [vmem:[%s1359 + $0x10] sm:$0xff]
        %v1363 = vld [vmem:[%s1359 + $0x18] sm:$0xff]
        %v1364 = vld [vmem:[%s1359 + $0x20] sm:$0xff]
        %v1365 = vld [vmem:[%s1359 + $0x28] sm:$0xff]
        %v1366 = vld [vmem:[%s1359 + $0x30] sm:$0xff]
        %v1367 = vld [vmem:[%s1359 + $0x38] sm:$0xff]
        %v1368 = vld [vmem:[%s1359 + $0x40] sm:$0xff]
        %v1369 = vld [vmem:[%s1359 + $0x48] sm:$0xff]
        %v1370 = vld [vmem:[%s1359 + $0x50] sm:$0xff]
        %v1371 = vld [vmem:[%s1359 + $0x58] sm:$0xff]
        %v1372 = vld [vmem:[%s1359 + $0x60] sm:$0xff]
        %v1373 = vld [vmem:[%s1359 + $0x68] sm:$0xff]
        %v1374 = vld [vmem:[%s1359 + $0x70] sm:$0xff]
        %v1375 = vld [vmem:[%s1359 + $0x78] sm:$0xff]
        %v1376 = vld [vmem:[%s1359 + $0x80] sm:$0xff]
        %v1377 = vld [vmem:[%s1359 + $0x88] sm:$0xff]
        %v1378 = vld [vmem:[%s1359 + $0x90] sm:$0xff]
        %v1379 = vld [vmem:[%s1359 + $0x98] sm:$0xff]
        %v1380 = vld [vmem:[%s1359 + $0xa0] sm:$0xff]
        %v1381 = vld [vmem:[%s1359 + $0xa8] sm:$0xff]
        %v1382 = vld [vmem:[%s1359 + $0xb0] sm:$0xff]
        %v1383 = vld [vmem:[%s1359 + $0xb8] sm:$0xff]
        %v1384 = vld [vmem:[%s1359 + $0xc0] sm:$0xff]
        %v1385 = vld [vmem:[%s1359 + $0xc8] sm:$0xff]
        %v1386 = vld [vmem:[%s1359 + $0xd0] sm:$0xff]
        %v1387 = vld [vmem:[%s1359 + $0xd8] sm:$0xff]
        %v1388 = vld [vmem:[%s1359 + $0xe0] sm:$0xff]
        %v1389 = vld [vmem:[%s1359 + $0xe8] sm:$0xff]
        %v1390 = vld [vmem:[%s1359 + $0xf0] sm:$0xff]
        %v1391 = vld [vmem:[%s1359 + $0xf8] sm:$0xff]
        %v1392 = vld [vmem:[%s1359 + $0x100] sm:$0xff]
        %v1393 = vld [vmem:[%s1359 + $0x108] sm:$0xff]
        %v1394 = vld [vmem:[%s1359 + $0x110] sm:$0xff]
        %v1395 = vld [vmem:[%s1359 + $0x118] sm:$0xff]
        %v1396 = vld [vmem:[%s1359 + $0x120] sm:$0xff]
        %v1397 = vld [vmem:[%s1359 + $0x128] sm:$0xff]
        %v1398 = vld [vmem:[%s1359 + $0x130] sm:$0xff]
        %v1399 = vld [vmem:[%s1359 + $0x138] sm:$0xff]
        %vm1400 = vsmask.f32 6400
        %v1401 = vrot.slane %v407, 1
        %v1402 = vrot.slane %v409, 2
        %v1403 = vor.u32 %v1401, %v1402
        %v1404 = vshrl.u32 %v362, 16
        %v1406 = vrot.slane %v1404, 1
        %v1407 = vrot.slane %v414, 2
        %v1408 = vor.u32 %v1406, %v1407
        %v1409 = vsel %vm1400, %v1403, %v1408
        %v1410 = vrot.slane %v419, 1
        %v1411 = vrot.slane %v421, 2
        %v1412 = vor.u32 %v1410, %v1411
        %v1413 = vshrl.u32 %v363, 16
        %v1415 = vrot.slane %v1413, 1
        %v1416 = vrot.slane %v426, 2
        %v1417 = vor.u32 %v1415, %v1416
        %v1418 = vsel %vm1400, %v1412, %v1417
        %v1460 = vunpack.c.l.b16 %v1360
        %v1461 = vunpack.c.h.b16 %v1360
        %v1462 = vunpack.c.l.b16 %v1361
        %v1463 = vunpack.c.h.b16 %v1361
        %v1464 = vunpack.c.l.b16 %v1362
        %v1465 = vunpack.c.h.b16 %v1362
        %v1466 = vunpack.c.l.b16 %v1363
        %v1467 = vunpack.c.h.b16 %v1363
        %v1468 = vunpack.c.l.b16 %v1364
        %v1469 = vunpack.c.h.b16 %v1364
        %v1470 = vunpack.c.l.b16 %v1365
        %v1471 = vunpack.c.h.b16 %v1365
        %v1472 = vunpack.c.l.b16 %v1366
        %v1473 = vunpack.c.h.b16 %v1366
        %v1474 = vunpack.c.l.b16 %v1367
        %v1475 = vunpack.c.h.b16 %v1367
        %v1476 = vunpack.c.l.b16 %v1368
        %v1477 = vunpack.c.h.b16 %v1368
        %v1478 = vunpack.c.l.b16 %v1369
        %v1479 = vunpack.c.h.b16 %v1369
        %v1480 = vunpack.c.l.b16 %v1370
        %v1481 = vunpack.c.h.b16 %v1370
        %v1482 = vunpack.c.l.b16 %v1371
        %v1483 = vunpack.c.h.b16 %v1371
        %v1484 = vunpack.c.l.b16 %v1372
        %v1485 = vunpack.c.h.b16 %v1372
        %v1486 = vunpack.c.l.b16 %v1373
        %v1487 = vunpack.c.h.b16 %v1373
        %v1488 = vunpack.c.l.b16 %v1374
        %v1489 = vunpack.c.h.b16 %v1374
        %v1490 = vunpack.c.l.b16 %v1375
        %v1491 = vunpack.c.h.b16 %v1375
        %v1492 = vunpack.c.l.b16 %v1376
        %v1493 = vunpack.c.h.b16 %v1376
        %v1494 = vunpack.c.l.b16 %v1377
        %v1495 = vunpack.c.h.b16 %v1377
        %v1496 = vunpack.c.l.b16 %v1378
        %v1497 = vunpack.c.h.b16 %v1378
        %v1498 = vunpack.c.l.b16 %v1379
        %v1499 = vunpack.c.h.b16 %v1379
        %v1500 = vunpack.c.l.b16 %v1380
        %v1501 = vunpack.c.h.b16 %v1380
        %v1502 = vunpack.c.l.b16 %v1381
        %v1503 = vunpack.c.h.b16 %v1381
        %v1504 = vunpack.c.l.b16 %v1382
        %v1505 = vunpack.c.h.b16 %v1382
        %v1506 = vunpack.c.l.b16 %v1383
        %v1507 = vunpack.c.h.b16 %v1383
        %v1508 = vunpack.c.l.b16 %v1384
        %v1509 = vunpack.c.h.b16 %v1384
        %v1510 = vunpack.c.l.b16 %v1385
        %v1511 = vunpack.c.h.b16 %v1385
        %v1512 = vunpack.c.l.b16 %v1386
        %v1513 = vunpack.c.h.b16 %v1386
        %v1514 = vunpack.c.l.b16 %v1387
        %v1515 = vunpack.c.h.b16 %v1387
        %v1516 = vunpack.c.l.b16 %v1388
        %v1517 = vunpack.c.h.b16 %v1388
        %v1518 = vunpack.c.l.b16 %v1389
        %v1519 = vunpack.c.h.b16 %v1389
        %v1520 = vunpack.c.l.b16 %v1390
        %v1521 = vunpack.c.h.b16 %v1390
        %v1522 = vunpack.c.l.b16 %v1391
        %v1523 = vunpack.c.h.b16 %v1391
        %v1524 = vunpack.c.l.b16 %v1392
        %v1525 = vunpack.c.h.b16 %v1392
        %v1526 = vunpack.c.l.b16 %v1393
        %v1527 = vunpack.c.h.b16 %v1393
        %v1528 = vunpack.c.l.b16 %v1394
        %v1529 = vunpack.c.h.b16 %v1394
        %v1530 = vunpack.c.l.b16 %v1395
        %v1531 = vunpack.c.h.b16 %v1395
        %v1532 = vunpack.c.l.b16 %v1396
        %v1533 = vunpack.c.h.b16 %v1396
        %v1534 = vunpack.c.l.b16 %v1397
        %v1535 = vunpack.c.h.b16 %v1397
        %v1536 = vunpack.c.l.b16 %v1398
        %v1537 = vunpack.c.h.b16 %v1398
        %v1538 = vunpack.c.l.b16 %v1399
        %v1539 = vunpack.c.h.b16 %v1399
        %v1540 = vpack.c.b16 %v1464, %v1460
        %v1541 = vpack.c.b16 %v1465, %v1461
        %v1542 = vpack.c.b16 %v1466, %v1462
        %v1543 = vpack.c.b16 %v1467, %v1463
        %v1544 = vpack.c.b16 %v1472, %v1468
        %v1545 = vpack.c.b16 %v1473, %v1469
        %v1546 = vpack.c.b16 %v1474, %v1470
        %v1547 = vpack.c.b16 %v1475, %v1471
        %v1548 = vpack.c.b16 %v1480, %v1476
        %v1549 = vpack.c.b16 %v1481, %v1477
        %v1550 = vpack.c.b16 %v1482, %v1478
        %v1551 = vpack.c.b16 %v1483, %v1479
        %v1552 = vpack.c.b16 %v1488, %v1484
        %v1553 = vpack.c.b16 %v1489, %v1485
        %v1554 = vpack.c.b16 %v1490, %v1486
        %v1555 = vpack.c.b16 %v1491, %v1487
        %v1556 = vpack.c.b16 %v1496, %v1492
        %v1557 = vpack.c.b16 %v1497, %v1493
        %v1558 = vpack.c.b16 %v1498, %v1494
        %v1559 = vpack.c.b16 %v1499, %v1495
        %v1560 = vpack.c.b16 %v1504, %v1500
        %v1561 = vpack.c.b16 %v1505, %v1501
        %v1562 = vpack.c.b16 %v1506, %v1502
        %v1563 = vpack.c.b16 %v1507, %v1503
        %v1564 = vpack.c.b16 %v1512, %v1508
        %v1565 = vpack.c.b16 %v1513, %v1509
        %v1566 = vpack.c.b16 %v1514, %v1510
        %v1567 = vpack.c.b16 %v1515, %v1511
        %v1568 = vpack.c.b16 %v1520, %v1516
        %v1569 = vpack.c.b16 %v1521, %v1517
        %v1570 = vpack.c.b16 %v1522, %v1518
        %v1571 = vpack.c.b16 %v1523, %v1519
        %v1572 = vpack.c.b16 %v1528, %v1524
        %v1573 = vpack.c.b16 %v1529, %v1525
        %v1574 = vpack.c.b16 %v1530, %v1526
        %v1575 = vpack.c.b16 %v1531, %v1527
        %v1576 = vpack.c.b16 %v1536, %v1532
        %v1577 = vpack.c.b16 %v1537, %v1533
        %v1578 = vpack.c.b16 %v1538, %v1534
        %v1579 = vpack.c.b16 %v1539, %v1535
        %v1621 = vsel %vm631, %v1418, 0
        %1623 = vmatprep.subr.bf16.mxu0 %v1541
        %1624 = vmatpush1.bf16.msra.mxu0 %v1540
        %1625 = vmatprep.subr.bf16.mxu0 %v1545
        %1626 = vmatpush1.bf16.msra.mxu0 %v1544
        %1627 = vmatprep.subr.bf16.mxu0 %v1549
        %1628 = vmatpush1.bf16.msra.mxu0 %v1548
        %1629 = vmatprep.subr.bf16.mxu0 %v1553
        %1630 = vmatpush1.bf16.msra.mxu0 %v1552
        %1631 = vmatprep.subr.bf16.mxu0 %v1557
        %1632 = vmatpush1.bf16.msra.mxu0 %v1556
        %1633 = vmatprep.subr.bf16.mxu0 %v1561
        %1634 = vmatpush1.bf16.msra.mxu0 %v1560
        %1635 = vmatprep.subr.bf16.mxu0 %v1565
        %1636 = vmatpush1.bf16.msra.mxu0 %v1564
        %1637 = vmatprep.subr.bf16.mxu0 %v1569
        %1638 = vmatpush1.bf16.msra.mxu0 %v1568
        %1639 = vmatprep.subr.bf16.mxu0 %v1573
        %1640 = vmatpush1.bf16.msra.mxu0 %v1572
        %1641 = vmatprep.subr.bf16.mxu0 %v1577
        %1642 = vmatpush1.bf16.msra.mxu0 %v1576
        %1643 = vmatprep.subr.bf16.mxu0 0
        %1644 = vmatpush1.bf16.msra.mxu0 0
        %1645 = vmatprep.subr.bf16.mxu0 0
        %1646 = vmatpush1.bf16.msra.mxu0 0
        %1647 = vmatprep.subr.bf16.mxu0 0
        %1648 = vmatpush1.bf16.msra.mxu0 0
        %1649 = vmatprep.subr.bf16.mxu0 0
        %1650 = vmatpush1.bf16.msra.mxu0 0
        %1651 = vmatprep.subr.bf16.mxu0 0
        %1652 = vmatpush1.bf16.msra.mxu0 0
        %1653 = vmatprep.subr.bf16.mxu0 0
        %1654 = vmatpush1.bf16.msra.mxu0 0
        %1655 = vmatprep.mubr.bf16.mxu0 %v1621
        %1656 = vmatmul.mubr.bf16.gmra.mrb[0].mxu0 %v1409
        %v1657 = vpop.f32.mrb[0].mxu0
        %v1658 = vadd.f32 0.0, %v1657
        %v1659 = vpop.f32.mrb[0].mxu0
        %v1660 = vadd.f32 0.0, %v1659
        %v1661 = vpop.f32.mrb[0].mxu0
        %v1662 = vadd.f32 0.0, %v1661
        %v1663 = vpop.f32.mrb[0].mxu0
        %v1664 = vadd.f32 0.0, %v1663
        %1665 = vdwg.mxu0
        %1666 = vmatprep.subr.bf16.mxu0 %v1543
        %1667 = vmatpush1.bf16.msra.mxu0 %v1542
        %1668 = vmatprep.subr.bf16.mxu0 %v1547
        %1669 = vmatpush1.bf16.msra.mxu0 %v1546
        %1670 = vmatprep.subr.bf16.mxu0 %v1551
        %1671 = vmatpush1.bf16.msra.mxu0 %v1550
        %1672 = vmatprep.subr.bf16.mxu0 %v1555
        %1673 = vmatpush1.bf16.msra.mxu0 %v1554
        %1674 = vmatprep.subr.bf16.mxu0 %v1559
        %1675 = vmatpush1.bf16.msra.mxu0 %v1558
        %1676 = vmatprep.subr.bf16.mxu0 %v1563
        %1677 = vmatpush1.bf16.msra.mxu0 %v1562
        %1678 = vmatprep.subr.bf16.mxu0 %v1567
        %1679 = vmatpush1.bf16.msra.mxu0 %v1566
        %1680 = vmatprep.subr.bf16.mxu0 %v1571
        %1681 = vmatpush1.bf16.msra.mxu0 %v1570
        %1682 = vmatprep.subr.bf16.mxu0 %v1575
        %1683 = vmatpush1.bf16.msra.mxu0 %v1574
        %1684 = vmatprep.subr.bf16.mxu0 %v1579
        %1685 = vmatpush1.bf16.msra.mxu0 %v1578
        %1686 = vmatprep.subr.bf16.mxu0 0
        %1687 = vmatpush1.bf16.msra.mxu0 0
        %1688 = vmatprep.subr.bf16.mxu0 0
        %1689 = vmatpush1.bf16.msra.mxu0 0
        %1690 = vmatprep.subr.bf16.mxu0 0
        %1691 = vmatpush1.bf16.msra.mxu0 0
        %1692 = vmatprep.subr.bf16.mxu0 0
        %1693 = vmatpush1.bf16.msra.mxu0 0
        %1694 = vmatprep.subr.bf16.mxu0 0
        %1695 = vmatpush1.bf16.msra.mxu0 0
        %1696 = vmatprep.subr.bf16.mxu0 0
        %1697 = vmatpush1.bf16.msra.mxu0 0
        %1698 = vmatprep.mubr.bf16.mxu0 %v1621
        %1699 = vmatmul.mubr.bf16.gmra.mrb[0].mxu0 %v1409
        %v1700 = vpop.f32.mrb[0].mxu0
        %v1701 = vadd.f32 0.0, %v1700
        %v1702 = vpop.f32.mrb[0].mxu0
        %v1703 = vadd.f32 0.0, %v1702
        %v1704 = vpop.f32.mrb[0].mxu0
        %v1705 = vadd.f32 0.0, %v1704
        %v1706 = vpop.f32.mrb[0].mxu0
        %v1707 = vadd.f32 0.0, %v1706
        %1708 = vdwg.mxu0
        %v1709 = vadd.f32 %v1351, %v1658
        %v1710 = vadd.f32 %v1352, %v1660
        %v1711 = vadd.f32 %v1353, %v1701
        %v1712 = vadd.f32 %v1354, %v1703
        %v1713 = vadd.f32 %v1355, %v1662
        %v1714 = vadd.f32 %v1356, %v1664
        %v1715 = vadd.f32 %v1357, %v1705
        %v1716 = vadd.f32 %v1358, %v1707
        %v1717 = vmul.f32 %v1709, %v1709
        %v1718 = vmul.f32 %v1710, %v1710
        %v1719 = vmul.f32 %v1713, %v1713
        %v1720 = vmul.f32 %v1714, %v1714
        %v1721 = vmul.f32 %v1711, %v1711
        %v1722 = vmul.f32 %v1712, %v1712
        %v1723 = vmul.f32 %v1715, %v1715
        %v1724 = vmul.f32 %v1716, %v1716
        %v1725 = vadd.f32 %v1717, %v1721
        %v1726 = vadd.f32 %v1718, %v1722
        %v1727 = vadd.f32 %v1719, %v1723
        %v1728 = vadd.f32 %v1720, %v1724
        %v1729 = vpack.c.bf16 %v1727, %v1725
        %v1730 = vpack.c.bf16 %v1728, %v1726
        %v1731 = vld [vmem:[#allocation9] sm:$0xf]
        %v1732 = vld [vmem:[#allocation9 + $0x4] sm:$0xf]
        %v1733 = vld [vmem:[#allocation9 + $0x8] sm:$0xf]
        %v1734 = vld [vmem:[#allocation9 + $0xc] sm:$0xf]
        %v1735 = vld [vmem:[#allocation9 + $0x10] sm:$0xf]
        %v1736 = vld [vmem:[#allocation9 + $0x14] sm:$0xf]
        %v1737 = vld [vmem:[#allocation9 + $0x18] sm:$0xf]
        %v1738 = vld [vmem:[#allocation9 + $0x1c] sm:$0xf]
        %v1739 = vld [vmem:[#allocation9 + $0x20] sm:$0xf]
        %v1740 = vld [vmem:[#allocation9 + $0x24] sm:$0xf]
        %v1741 = vld [vmem:[#allocation9 + $0x28] sm:$0xf]
        %v1742 = vld [vmem:[#allocation9 + $0x2c] sm:$0xf]
        %v1743 = vld [vmem:[#allocation9 + $0x30] sm:$0xf]
        %v1744 = vld [vmem:[#allocation9 + $0x34] sm:$0xf]
        %v1745 = vld [vmem:[#allocation9 + $0x38] sm:$0xf]
        %v1746 = vld [vmem:[#allocation9 + $0x3c] sm:$0xf]
        %v1747 = vld [vmem:[#allocation9 + $0x40] sm:$0xf]
        %v1748 = vld [vmem:[#allocation9 + $0x44] sm:$0xf]
        %v1749 = vld [vmem:[#allocation9 + $0x48] sm:$0xf]
        %v1750 = vld [vmem:[#allocation9 + $0x4c] sm:$0xf]
        %v1751 = vld [vmem:[#allocation9 + $0x50] sm:$0xf]
        %v1752 = vld [vmem:[#allocation9 + $0x54] sm:$0xf]
        %v1753 = vld [vmem:[#allocation9 + $0x58] sm:$0xf]
        %v1754 = vld [vmem:[#allocation9 + $0x5c] sm:$0xf]
        %v1755 = vld [vmem:[#allocation9 + $0x60] sm:$0xf]
        %v1756 = vld [vmem:[#allocation9 + $0x64] sm:$0xf]
        %v1757 = vld [vmem:[#allocation9 + $0x68] sm:$0xf]
        %v1758 = vld [vmem:[#allocation9 + $0x6c] sm:$0xf]
        %v1759 = vld [vmem:[#allocation9 + $0x70] sm:$0xf]
        %v1760 = vld [vmem:[#allocation9 + $0x74] sm:$0xf]
        %v1761 = vld [vmem:[#allocation9 + $0x78] sm:$0xf]
        %v1762 = vld [vmem:[#allocation9 + $0x7c] sm:$0xf]
        %v1795 = vunpack.c.l.b16 %v1731
        %v1796 = vunpack.c.l.b16 %v1732
        %v1797 = vunpack.c.l.b16 %v1733
        %v1798 = vunpack.c.l.b16 %v1734
        %v1799 = vunpack.c.l.b16 %v1735
        %v1800 = vunpack.c.l.b16 %v1736
        %v1801 = vunpack.c.l.b16 %v1737
        %v1802 = vunpack.c.l.b16 %v1738
        %v1803 = vunpack.c.l.b16 %v1739
        %v1804 = vunpack.c.l.b16 %v1740
        %v1805 = vunpack.c.l.b16 %v1741
        %v1806 = vunpack.c.l.b16 %v1742
        %v1807 = vunpack.c.l.b16 %v1743
        %v1808 = vunpack.c.l.b16 %v1744
        %v1809 = vunpack.c.l.b16 %v1745
        %v1810 = vunpack.c.l.b16 %v1746
        %v1811 = vunpack.c.l.b16 %v1747
        %v1812 = vunpack.c.l.b16 %v1748
        %v1813 = vunpack.c.l.b16 %v1749
        %v1814 = vunpack.c.l.b16 %v1750
        %v1815 = vunpack.c.l.b16 %v1751
        %v1816 = vunpack.c.l.b16 %v1752
        %v1817 = vunpack.c.l.b16 %v1753
        %v1818 = vunpack.c.l.b16 %v1754
        %v1819 = vunpack.c.l.b16 %v1755
        %v1820 = vunpack.c.l.b16 %v1756
        %v1821 = vunpack.c.l.b16 %v1757
        %v1822 = vunpack.c.l.b16 %v1758
        %v1823 = vunpack.c.l.b16 %v1759
        %v1824 = vunpack.c.l.b16 %v1760
        %v1825 = vunpack.c.l.b16 %v1761
        %v1826 = vunpack.c.l.b16 %v1762
        %v1827 = vpack.c.b16 %v1796, %v1795
        %v1828 = vpack.c.b16 %v1798, %v1797
        %v1829 = vpack.c.b16 %v1800, %v1799
        %v1830 = vpack.c.b16 %v1802, %v1801
        %v1831 = vpack.c.b16 %v1804, %v1803
        %v1832 = vpack.c.b16 %v1806, %v1805
        %v1833 = vpack.c.b16 %v1808, %v1807
        %v1834 = vpack.c.b16 %v1810, %v1809
        %v1835 = vpack.c.b16 %v1812, %v1811
        %v1836 = vpack.c.b16 %v1814, %v1813
        %v1837 = vpack.c.b16 %v1816, %v1815
        %v1838 = vpack.c.b16 %v1818, %v1817
        %v1839 = vpack.c.b16 %v1820, %v1819
        %v1840 = vpack.c.b16 %v1822, %v1821
        %v1841 = vpack.c.b16 %v1824, %v1823
        %v1842 = vpack.c.b16 %v1826, %v1825
        %1859 = vmatprep.subr.bf16.mxu0 0
        %1860 = vmatpush1.bf16.msra.mxu0 %v1827
        %1861 = vmatprep.subr.bf16.mxu0 0
        %1862 = vmatpush1.bf16.msra.mxu0 %v1828
        %1863 = vmatprep.subr.bf16.mxu0 0
        %1864 = vmatpush1.bf16.msra.mxu0 %v1829
        %1865 = vmatprep.subr.bf16.mxu0 0
        %1866 = vmatpush1.bf16.msra.mxu0 %v1830
        %1867 = vmatprep.subr.bf16.mxu0 0
        %1868 = vmatpush1.bf16.msra.mxu0 %v1831
        %1869 = vmatprep.subr.bf16.mxu0 0
        %1870 = vmatpush1.bf16.msra.mxu0 %v1832
        %1871 = vmatprep.subr.bf16.mxu0 0
        %1872 = vmatpush1.bf16.msra.mxu0 %v1833
        %1873 = vmatprep.subr.bf16.mxu0 0
        %1874 = vmatpush1.bf16.msra.mxu0 %v1834
        %1875 = vmatprep.subr.bf16.mxu0 0
        %1876 = vmatpush1.bf16.msra.mxu0 %v1835
        %1877 = vmatprep.subr.bf16.mxu0 0
        %1878 = vmatpush1.bf16.msra.mxu0 %v1836
        %1879 = vmatprep.subr.bf16.mxu0 0
        %1880 = vmatpush1.bf16.msra.mxu0 %v1837
        %1881 = vmatprep.subr.bf16.mxu0 0
        %1882 = vmatpush1.bf16.msra.mxu0 %v1838
        %1883 = vmatprep.subr.bf16.mxu0 0
        %1884 = vmatpush1.bf16.msra.mxu0 %v1839
        %1885 = vmatprep.subr.bf16.mxu0 0
        %1886 = vmatpush1.bf16.msra.mxu0 %v1840
        %1887 = vmatprep.subr.bf16.mxu0 0
        %1888 = vmatpush1.bf16.msra.mxu0 %v1841
        %1889 = vmatprep.subr.bf16.mxu0 0
        %1890 = vmatpush1.bf16.msra.mxu0 %v1842
        %1891 = vmatprep.mubr.bf16.mxu0 %v1730
        %1892 = vmatmul.mubr.bf16.gmra.mrb[0].mxu0 %v1729
        %v1893 = vpop.f32.mrb[0].mxu0
        %v1894 = vadd.f32 0.0, %v1893
        %v1895 = vpop.f32.mrb[0].mxu0
        %v1896 = vpop.f32.mrb[0].mxu0
        %v1897 = vadd.f32 0.0, %v1896
        %v1898 = vpop.f32.mrb[0].mxu0
        %1899 = vdwg.mxu0
        %s1900 = smul.u32 %s30, 16
        %s1901 = scalar_lea.vmem %s309, %s1900 [#allocation11]
        %1902 = vst [vmem:[%s1901] sm:$0xff] %v1894
        %1903 = vst [vmem:[%s1901 + $0x8] sm:$0xff] %v1897
        %v1904 = vmax.f32 %v1894, %v1897
        %v1905 = vrot.slane %v1904, 4
        %v1906 = vmax.f32 %v1904, %v1905
        %v1907 = vrot.slane %v1906, 2
        %v1908 = vmax.f32 %v1906, %v1907
        %v1909 = vrot.slane %v1908, 1
        %v1910 = vmax.f32 %v1908, %v1909
        %p1911 = scmp.eq.s32.totalorder %s30, 0
        // Predicated region
        $region53: #{tpu_custom_call.1} parent=35 // pred_check
          %p1912 = pneg %p1911
        $region54: #{tpu_custom_call.1} parent=35 // pred_check_branch
          %1914 = sbr.rel (%p1912) target = $region56
        $region55: #{tpu_custom_call.1} parent=35 // pred_region
          %1915 = vst [vmem:[#allocation2] sm:$0x1] %v1910
        $region56: #{tpu_custom_call.1} parent=35 // pred_fallthru
          _
        %p1916 = scmp.ne.s32.totalorder %s30, 0
        // Predicated region
        $region57: #{tpu_custom_call.1} parent=35 // pred_check
          %p1917 = pneg %p1916
        $region58: #{tpu_custom_call.1} parent=35 // pred_check_branch
          %1919 = sbr.rel (%p1917) target = $region60
        $region59: #{tpu_custom_call.1} parent=35 // pred_region
          %v1920 = vld [vmem:[#allocation2] sm:$0x1]
          %v1921 = vmax.f32 %v1920, %v1910
          %1922 = vst [vmem:[#allocation2] sm:$0x1] %v1921
        $region60: #{tpu_custom_call.1} parent=35 // pred_fallthru
          _
        // Predicated region
        $region61: #{tpu_custom_call.1} parent=35 // pred_check
          %p1923 = pneg %p1911
        $region62: #{tpu_custom_call.1} parent=35 // pred_check_branch
          %1925 = sbr.rel (%p1923) target = $region64
        $region63: #{tpu_custom_call.1} parent=35 // pred_region
          %v1926 = vld [vmem:[#allocation2] sm:$0x1]
          %vm1927 = vcmask 1040384
          %v1928 = vsel %vm1927, %v1926, -inf
          %1929 = vmax.xlane.f32.xlu0 %v1928
          %v1930 = vpop.xlane.xlu0 %1929
          %v1931 = vrot.slane %v1930, 4
          %v1932 = vmax.f32 %v1930, %v1931
          %v1933 = vrot.slane %v1932, 2
          %v1934 = vmax.f32 %v1932, %v1933
          %v1935 = vrot.slane %v1934, 1
          %v1936 = vmax.f32 %v1934, %v1935
          %s1937 = vtos %v1936
          %s1938 = smax.f32 %s1937, 1e-05
          %v1939 = vstv %s1938
          %v1940 = vlog2.pop %v1939
          %v1941 = vmul.f32 %v1940, 0.6931472
          %s1942 = vtos %v1941
          %s1943 = smul.f32 %s1942, 0.4342945
          %s1944 = smul.f32 %s1943, 20.0
          %v1945 = vld [vmem:[%s309] sm:$0xff]
          %v1946 = vld [vmem:[%s309 + $0x8] sm:$0xff]
          %v1947 = vmax.f32 %v1945, 1e-05
          %v1948 = vmax.f32 %v1946, 1e-05
          %v1949 = vlog2.pop %v1947
          %v1950 = vmul.f32 %v1949, 0.6931472
          %v1951 = vlog2.pop %v1948
          %v1952 = vmul.f32 %v1951, 0.6931472
          %v1953 = vmul.f32 %v1950, 0.4342945
          %v1954 = vmul.f32 %v1952, 0.4342945
          %v1955 = vmul.f32 %v1953, 20.0
          %v1956 = vmul.f32 %v1954, 20.0
          %v1957 = vstv %s1944
          %v1958 = vsub.f32 %v1955, %v1957
          %v1959 = vsub.f32 %v1956, %v1957
          %v1960 = vmax.f32 %v1958, -80.0
          %v1961 = vmax.f32 %v1959, -80.0
          %1962 = vst [vmem:[%s309] sm:$0xff] %v1960
          %1963 = vst [vmem:[%s309 + $0x8] sm:$0xff] %v1961
        $region64: #{tpu_custom_call.1} parent=35 // pred_fallthru
          _
        %s1964 = sand.u32 %s145, 1
        %s1965 = scalar_lea.sflag [#allocation5], %s1964
        %s1966 = sand.u32 %s145, 1
        %s1967 = smul.addr %s1966, 16
        %s1968 = scalar_lea.vmem [#allocation11], %s1967
        // Predicated region
        $region65: #{tpu_custom_call.1} parent=35 // pred_check
          %p1969 = pneg %p155
        $region66: #{tpu_custom_call.1} parent=35 // pred_check_branch
          %1971 = sbr.rel (%p1969) target = $region68
        $region67: #{tpu_custom_call.1} parent=35 // pred_region
          %s1973 = ssub.s32 256, 256
          %1974 = vsyncadd %s1965, %s1973
          %s1975 = smul.addr %s29, 2
          %s1976 = smul.addr %s1975, 128
          %s1977 = scalar_lea.hbm %s4, %s1976
          %s1978 = sshll.u32 %s1968, 4
          %s1979 = int_to_ptr.vmem [resolvable:$true] %s1978
          %1984 = dma.vmem_to_hbm [thread:$0]  %s1979, 256, %s1977, %s1965, 128, 128, 8
        $region68: #{tpu_custom_call.1} parent=35 // pred_fallthru
          _
      $region36: #{tpu_custom_call.1} parent=5 // pred_fallthru
        _
      %p1985 = scmp.le.s32.totalorder 2, %s20
      // Predicated region
      $region69: #{tpu_custom_call.1} parent=5 // pred_check
        %p1986 = pneg %p1985
      $region70: #{tpu_custom_call.1} parent=5 // pred_check_branch
        %1988 = sbr.rel (%p1986) target = $region72
      $region71: #{tpu_custom_call.1} parent=5 // pred_region
        %s1989 = ssub.s32 %s20, 2
        // Predicated region
        $region73: #{tpu_custom_call.1} parent=71 // pred_check
          %p1990 = pneg %p161
        $region74: #{tpu_custom_call.1} parent=71 // pred_check_branch
          %1992 = sbr.rel (%p1990) target = $region76
        $region75: #{tpu_custom_call.1} parent=71 // pred_region
          %s1993 = sand.u32 %s146, 1
          %s1994 = scalar_lea.sflag [#allocation5], %s1993
          %s1995 = sand.u32 %s146, 1
          %s1996 = smul.addr %s1995, 16
          %s1997 = scalar_lea.vmem [#allocation11], %s1996
          %1998 = dma.done %s1994, 256
        $region76: #{tpu_custom_call.1} parent=71 // pred_fallthru
          _
      $region72: #{tpu_custom_call.1} parent=5 // pred_fallthru
        _
    $region6: #{tpu_custom_call.1} parent=1 // loop_footer
      %s24 = sadd.s32 1, %s20
    $region7: #{tpu_custom_call.1} parent=1 // loop_footer_branch
      %19 = sbr.rel target = $region3
    $region8: #{tpu_custom_call.1} parent=1 // loop_exit
      _
    %1999 = vsyncpa [#allocation4], 1
    %s2000 = scalar_lea.sflag [#allocation4], 1
    %2001 = vsyncpa %s2000, 1
    %2002 = vsyncpa [#allocation7], 1
    %s2003 = scalar_lea.sflag [#allocation7], 1
    %2004 = vsyncpa %s2003, 1
    %2005 = vsyncpa [#allocation10], 1
    %2006 = vsyncpa [#allocation5], 1
    %s2007 = scalar_lea.sflag [#allocation5], 1
    %2008 = vsyncpa %s2007, 1

</llo_original>
